<compile_context>
chip_gen: v5e
topology: v5e:2x2
jax: 0.10.0
libtpu: 0.0.40
codegen_flags: <defaults>
</compile_context>

<pallas_src>
import math
import jax
import jax.numpy as jnp
from jax import lax
from jax.experimental import pallas as pl
from jax.experimental.pallas import tpu as pltpu

# ----- small synthetic model config (Qwen2-style decoder) --------------------
B, S, D, H, F, V, L = 2, 8, 32, 4, 64, 128, 2
DH = D // H
BS = B * S
EPS = 1e-6
ROPE_THETA = 1_000_000.0
NEG_INF = -1e30


def _rms_norm(x, w):
    var = jnp.mean(x * x, axis=-1, keepdims=True)
    return x * jax.lax.rsqrt(var + EPS) * w


# ----- fused decoder stack kernel (grid over layers, residual in VMEM) -------
def fused_decoder_kernel(
        x0_ref,                                             # [BS, D] bf16 embeddings
        ln1_ref, wq_ref, bq_ref, wk_ref, bk_ref, wv_ref, bv_ref, wo_ref,
        ln2_ref, wg_ref, wu_ref, wd_ref,                    # per-layer weights (leading L blocked to 1)
        cos_ref, sin_ref, rot_ref, hmask_ref, bias_ref,     # shared RoPE / head / causal tables
        lnf_ref, wlm_ref,                                   # final norm + LM head
        logits_ref,                                         # out: [B, V] last-token logits (f32)
        x_res):                                             # scratch: [BS, D] f32 residual stream
    l = pl.program_id(0)

    @pl.when(l == 0)
    def _():
        x_res[...] = x0_ref[...].astype(jnp.float32)

    x = x_res[...]                                          # [BS, D] f32
    scale = 1.0 / math.sqrt(DH)

    # --- self-attention block ---
    h1 = _rms_norm(x, ln1_ref[0].astype(jnp.float32))
    h1b = h1.astype(jnp.bfloat16)
    q = jnp.dot(h1b, wq_ref[0], preferred_element_type=jnp.float32) + bq_ref[0].astype(jnp.float32)
    k = jnp.dot(h1b, wk_ref[0], preferred_element_type=jnp.float32) + bk_ref[0].astype(jnp.float32)
    v = jnp.dot(h1b, wv_ref[0], preferred_element_type=jnp.float32) + bv_ref[0].astype(jnp.float32)

    # RoPE on the full [BS, D] tensors.  rotate_half is a signed per-head
    # permutation -> applied as a tiny bf16 MXU matmul (no lane slicing).
    cosf = cos_ref[...]
    sinf = sin_ref[...]
    rot = rot_ref[...]
    q_rot = jnp.dot(q.astype(jnp.bfloat16), rot, preferred_element_type=jnp.float32)
    k_rot = jnp.dot(k.astype(jnp.bfloat16), rot, preferred_element_type=jnp.float32)
    q = q * cosf + q_rot * sinf
    k = k * cosf + k_rot * sinf

    # All heads at once: stack head-masked copies of q along the sublane axis
    # ([H*BS, D]) so QK^T and PV become two bf16 MXU matmuls (no tiny per-head
    # matmuls, no lane-axis slicing / concatenation).
    q_all = jnp.concatenate(
        [q * hmask_ref[h] for h in range(H)], axis=0).astype(jnp.bfloat16)   # [H*BS, D]
    k_b = k.astype(jnp.bfloat16)
    v_b = v.astype(jnp.bfloat16)

    s = lax.dot_general(q_all, k_b, (((1,), (1,)), ((), ())),
                        preferred_element_type=jnp.float32) * scale          # [H*BS, BS]
    s = s + bias_ref[...]                          # block-diagonal causal mask (per batch)
    s = s - jnp.max(s, axis=-1, keepdims=True)     # keep max-subtraction before exp
    p = jnp.exp(s)
    p = p * pl.reciprocal(jnp.sum(p, axis=-1, keepdims=True), approx=True)

    ctx = jnp.dot(p.astype(jnp.bfloat16), v_b,
                  preferred_element_type=jnp.float32)                        # [H*BS, D]
    attn = jnp.zeros((BS, D), jnp.float32)
    for h in range(H):                             # 16-row (sublane-tile-aligned) slices
        attn = attn + ctx[h * BS:(h + 1) * BS, :] * hmask_ref[h]

    attn = jnp.dot(attn.astype(jnp.bfloat16), wo_ref[0],
                   preferred_element_type=jnp.float32)
    x = x + attn

    # --- SwiGLU MLP block ---
    h2 = _rms_norm(x, ln2_ref[0].astype(jnp.float32)).astype(jnp.bfloat16)
    g = jnp.dot(h2, wg_ref[0], preferred_element_type=jnp.float32)
    u = jnp.dot(h2, wu_ref[0], preferred_element_type=jnp.float32)
    mlp = (g * jax.nn.sigmoid(g)) * u              # silu(g) * u, f32 on the VPU/EUP
    mlp = jnp.dot(mlp.astype(jnp.bfloat16), wd_ref[0],
                  preferred_element_type=jnp.float32)
    x = x + mlp

    x_res[...] = x                                 # residual stays resident in VMEM (f32)

    # --- final RMSNorm + LM head, last token of each sequence only ----------
    @pl.when(l == L - 1)
    def _():
        xf = x_res[...]
        x_last = jnp.concatenate(
            [xf[b * S + S - 1: b * S + S, :] for b in range(B)], axis=0)     # [B, D]
        hf = _rms_norm(x_last, lnf_ref[...].astype(jnp.float32)).astype(jnp.bfloat16)
        logits_ref[...] = jnp.dot(hf, wlm_ref[...],
                                  preferred_element_type=jnp.float32)        # [B, V] lane-dense


# ----- wrapper ----------------------------------------------------------------
def qwen_extractor_forward(token_ids, params):
    """Prefill forward over the synthetic Qwen2-style decoder -> last-token logits."""
    x0 = params["emb"][token_ids].reshape(BS, D)           # [B*S, D] bf16, batch folded

    lay = params["layers"]
    layer_names = ("ln1", "wq", "bq", "wk", "bk", "wv", "bv", "wo",
                   "ln2", "wg", "wu", "wd")
    layer_ws = [jnp.stack([p[n] for p in lay], axis=0) for n in layer_names]
    shared = [params["cos"], params["sin"], params["rot"], params["hmask"],
              params["bias"], params["lnf"], params["wlm"]]

    def per_layer(a):
        nd = a.ndim
        return pl.BlockSpec((1,) + a.shape[1:],
                            lambda l, _nd=nd: (l,) + (0,) * (_nd - 1))

    def full(a):
        nd = a.ndim
        return pl.BlockSpec(a.shape, lambda l, _nd=nd: (0,) * _nd)

    logits = pl.pallas_call(
        fused_decoder_kernel,
        out_shape=jax.ShapeDtypeStruct((B, V), jnp.float32),
        grid=(L,),
        in_specs=[full(x0)] + [per_layer(w) for w in layer_ws] + [full(a) for a in shared],
        out_specs=pl.BlockSpec((B, V), lambda l: (0, 0)),
        scratch_shapes=[pltpu.VMEM((BS, D), jnp.float32)],
        compiler_params=pltpu.CompilerParams(dimension_semantics=("arbitrary",)),
    )(x0, *layer_ws, *shared)
    return logits


# ----- deterministic parameter / table init ------------------------------------
def make_params(key):
    def nrm(k, shape, scale=0.02):
        return (scale * jax.random.normal(k, shape, jnp.float32)).astype(jnp.bfloat16)

    # Shared RoPE tables, tiled to the full [B*S, D] activation layout (f32).
    inv_freq = 1.0 / (ROPE_THETA ** (jnp.arange(0, DH, 2, jnp.float32) / DH))
    freqs = jnp.outer(jnp.arange(S, dtype=jnp.float32), inv_freq)            # [S, DH/2]
    emb = jnp.concatenate([freqs, freqs], axis=-1)                           # [S, DH]
    cos_full = jnp.tile(jnp.tile(jnp.cos(emb), (1, H)), (B, 1))              # [BS, D]
    sin_full = jnp.tile(jnp.tile(jnp.sin(emb), (1, H)), (B, 1))              # [BS, D]

    # Signed per-head "rotate_half" permutation matrix (applied on the MXU).
    i = jnp.arange(D)
    pos_in_head = i % DH
    src = jnp.where(pos_in_head < DH // 2, i + DH // 2, i - DH // 2)
    sign = jnp.where(pos_in_head < DH // 2, -1.0, 1.0)
    rot = jnp.zeros((D, D), jnp.float32).at[src, i].set(sign).astype(jnp.bfloat16)

    # Head-selection masks [H, 1, D] (f32 so element-wise math stays f32).
    hmask = (i[None, :] // DH == jnp.arange(H)[:, None]).astype(jnp.float32)[:, None, :]

    # Additive causal + batch-block attention bias, tiled over heads: [H*BS, BS].
    r = jnp.arange(BS)
    allowed = ((r[:, None] // S) == (r[None, :] // S)) & (r[None, :] <= r[:, None])
    bias = jnp.tile(jnp.where(allowed, 0.0, NEG_INF).astype(jnp.float32), (H, 1))

    keys = jax.random.split(key, 2 + 10 * L)
    params = {
        "emb": nrm(keys[0], (V, D)),
        "lnf": jnp.ones((1, D), jnp.bfloat16),
        "wlm": nrm(keys[1], (D, V)),
        "cos": cos_full, "sin": sin_full, "rot": rot,
        "hmask": hmask, "bias": bias,
        "layers": [],
    }
    for l in range(L):
        k = keys[2 + 10 * l: 2 + 10 * (l + 1)]
        params["layers"].append({
            "ln1": jnp.ones((1, D), jnp.bfloat16),
            "wq": nrm(k[0], (D, D)), "bq": nrm(k[1], (1, D)),
            "wk": nrm(k[2], (D, D)), "bk": nrm(k[3], (1, D)),
            "wv": nrm(k[4], (D, D)), "bv": nrm(k[5], (1, D)),
            "wo": nrm(k[6], (D, D)),
            "ln2": jnp.ones((1, D), jnp.bfloat16),
            "wg": nrm(k[7], (D, F)), "wu": nrm(k[8], (D, F)),
            "wd": nrm(k[9], (F, D)),
        })
    return params


if __name__ == "__main__":
    root = jax.random.PRNGKey(0)
    k_param, k_ids = jax.random.split(root)
    params = make_params(k_param)

    # Synthetic "prompt" token ids (stand-in for processor output); B=2 "images".
    token_ids = jax.random.randint(k_ids, (B, S), 0, V, dtype=jnp.int32)

    logits = qwen_extractor_forward(token_ids, params)      # [B, V] last-token logits
    logits = jax.block_until_ready(logits)

    # Greedy next-token pick (one step of generate()).
    next_ids = jax.block_until_ready(jnp.argmax(logits, axis=-1))

    assert logits.shape == (B, V) and next_ids.shape == (B,)
    assert bool(jnp.all(jnp.isfinite(logits)))
    print("KERNEL_OK")
</pallas_src>

<mosaic_0001>
module attributes {stable_mosaic.version = 11 : i64} {
  func.func @fused_decoder_kernel(%arg0: i32, %arg1: memref<16x32xbf16, #tpu.memory_space<vmem>>, %arg2: memref<1x1x32xbf16, #tpu.memory_space<vmem>>, %arg3: memref<1x32x32xbf16, #tpu.memory_space<vmem>>, %arg4: memref<1x1x32xbf16, #tpu.memory_space<vmem>>, %arg5: memref<1x32x32xbf16, #tpu.memory_space<vmem>>, %arg6: memref<1x1x32xbf16, #tpu.memory_space<vmem>>, %arg7: memref<1x32x32xbf16, #tpu.memory_space<vmem>>, %arg8: memref<1x1x32xbf16, #tpu.memory_space<vmem>>, %arg9: memref<1x32x32xbf16, #tpu.memory_space<vmem>>, %arg10: memref<1x1x32xbf16, #tpu.memory_space<vmem>>, %arg11: memref<1x32x64xbf16, #tpu.memory_space<vmem>>, %arg12: memref<1x32x64xbf16, #tpu.memory_space<vmem>>, %arg13: memref<1x64x32xbf16, #tpu.memory_space<vmem>>, %arg14: memref<16x32xf32, #tpu.memory_space<vmem>>, %arg15: memref<16x32xf32, #tpu.memory_space<vmem>>, %arg16: memref<32x32xbf16, #tpu.memory_space<vmem>>, %arg17: memref<4x1x32xf32, #tpu.memory_space<vmem>>, %arg18: memref<64x16xf32, #tpu.memory_space<vmem>>, %arg19: memref<1x32xbf16, #tpu.memory_space<vmem>>, %arg20: memref<32x128xbf16, #tpu.memory_space<vmem>>, %arg21: memref<2x128xf32, #tpu.memory_space<vmem>>, %arg22: memref<16x32xf32, #tpu.memory_space<vmem>>) attributes {dimension_semantics = [#tpu.dimension_semantics<arbitrary>], iteration_bounds = array<i64: 2>, scalar_prefetch = 0 : i64, scratch_operands = 1 : i64, tpu.core_type = #tpu.core_type<tc>, window_params = [{pipeline_mode = #tpu.pipeline_mode<synchronous>, transform_indices = @transform_0, window_bounds = array<i64: 16, 32>}, {transform_indices = @transform_1, window_bounds = array<i64: 1, 1, 32>}, {transform_indices = @transform_2, window_bounds = array<i64: 1, 32, 32>}, {transform_indices = @transform_3, window_bounds = array<i64: 1, 1, 32>}, {transform_indices = @transform_4, window_bounds = array<i64: 1, 32, 32>}, {transform_indices = @transform_5, window_bounds = array<i64: 1, 1, 32>}, {transform_indices = @transform_6, window_bounds = array<i64: 1, 32, 32>}, {transform_indices = @transform_7, window_bounds = array<i64: 1, 1, 32>}, {transform_indices = @transform_8, window_bounds = array<i64: 1, 32, 32>}, {transform_indices = @transform_9, window_bounds = array<i64: 1, 1, 32>}, {transform_indices = @transform_10, window_bounds = array<i64: 1, 32, 64>}, {transform_indices = @transform_11, window_bounds = array<i64: 1, 32, 64>}, {transform_indices = @transform_12, window_bounds = array<i64: 1, 64, 32>}, {pipeline_mode = #tpu.pipeline_mode<synchronous>, transform_indices = @transform_13, window_bounds = array<i64: 16, 32>}, {pipeline_mode = #tpu.pipeline_mode<synchronous>, transform_indices = @transform_14, window_bounds = array<i64: 16, 32>}, {pipeline_mode = #tpu.pipeline_mode<synchronous>, transform_indices = @transform_15, window_bounds = array<i64: 32, 32>}, {pipeline_mode = #tpu.pipeline_mode<synchronous>, transform_indices = @transform_16, window_bounds = array<i64: 4, 1, 32>}, {pipeline_mode = #tpu.pipeline_mode<synchronous>, transform_indices = @transform_17, window_bounds = array<i64: 64, 16>}, {pipeline_mode = #tpu.pipeline_mode<synchronous>, transform_indices = @transform_18, window_bounds = array<i64: 1, 32>}, {pipeline_mode = #tpu.pipeline_mode<synchronous>, transform_indices = @transform_19, window_bounds = array<i64: 32, 128>}, {pipeline_mode = #tpu.pipeline_mode<synchronous>, transform_indices = @transform_20, window_bounds = array<i64: 2, 128>}]} {
    %c0_i32 = arith.constant 0 : i32
    %0 = arith.cmpi eq, %arg0, %c0_i32 : i32
    %1 = arith.extui %0 : i1 to i32
    %c0_i32_0 = arith.constant 0 : i32
    %2 = arith.cmpi ne, %1, %c0_i32_0 : i32
    scf.if %2 {
      %c0_91 = arith.constant 0 : index
      %c0_92 = arith.constant 0 : index
      %162 = vector.load %arg1[%c0_91, %c0_92] : memref<16x32xbf16, #tpu.memory_space<vmem>>, vector<16x32xbf16>
      %163 = arith.extf %162 : vector<16x32xbf16> to vector<16x32xf32>
      %c0_93 = arith.constant 0 : index
      %c0_94 = arith.constant 0 : index
      %164 = vector.load %arg22[%c0_93, %c0_94] : memref<16x32xf32, #tpu.memory_space<vmem>>, vector<16x32xf32>
      tpu.vector_store %arg22[%c0_93, %c0_94], %163 {strides = array<i32>} : memref<16x32xf32, #tpu.memory_space<vmem>>, vector<16x32xf32>,
    } else {
    }
    %c0 = arith.constant 0 : index
    %c0_1 = arith.constant 0 : index
    %3 = vector.load %arg22[%c0, %c0_1] : memref<16x32xf32, #tpu.memory_space<vmem>>, vector<16x32xf32>
    %c0_2 = arith.constant 0 : index
    %c0_3 = arith.constant 0 : index
    %c0_4 = arith.constant 0 : index
    %4 = vector.load %arg2[%c0_2, %c0_3, %c0_4] : memref<1x1x32xbf16, #tpu.memory_space<vmem>>, vector<1x1x32xbf16>
    %5 = vector.shape_cast %4 : vector<1x1x32xbf16> to vector<1x32xbf16>
    %6 = arith.extf %5 : vector<1x32xbf16> to vector<1x32xf32>
    %7 = arith.mulf %3, %3 : vector<16x32xf32>
    %cst = arith.constant dense<0.000000e+00> : vector<16xf32>
    %8 = vector.multi_reduction <add>, %7, %cst [1] : vector<16x32xf32> to vector<16xf32>
    %9 = vector.shape_cast %8 : vector<16xf32> to vector<16x1xf32>
    %cst_5 = arith.constant 3.200000e+01 : f32
    %10 = vector.broadcast %cst_5 : f32 to vector<16x1xf32>
    %11 = arith.divf %9, %10 : vector<16x1xf32>
    %cst_6 = arith.constant 9.99999997E-7 : f32
    %12 = vector.broadcast %cst_6 : f32 to vector<16x1xf32>
    %13 = arith.addf %11, %12 : vector<16x1xf32>
    %14 = math.rsqrt %13 : vector<16x1xf32>
    %15 = vector.broadcast %14 : vector<16x1xf32> to vector<16x32xf32>
    %16 = arith.mulf %3, %15 : vector<16x32xf32>
    %17 = vector.broadcast %6 : vector<1x32xf32> to vector<16x32xf32>
    %18 = arith.mulf %16, %17 : vector<16x32xf32>
    %19 = arith.truncf %18 : vector<16x32xf32> to vector<16x32xbf16>
    %c0_7 = arith.constant 0 : index
    %c0_8 = arith.constant 0 : index
    %c0_9 = arith.constant 0 : index
    %20 = vector.load %arg3[%c0_7, %c0_8, %c0_9] : memref<1x32x32xbf16, #tpu.memory_space<vmem>>, vector<1x32x32xbf16>
    %21 = vector.shape_cast %20 : vector<1x32x32xbf16> to vector<32x32xbf16>
    %cst_10 = arith.constant dense<0.000000e+00> : vector<16x32xf32>
    %22 = tpu.matmul %19, %21, %cst_10 {dimension_numbers = #tpu.dot_dimension_numbers<[1], [0], [0], [1], [0, 0, 1, 1], [], []>} : vector<16x32xbf16>, vector<32x32xbf16>, vector<16x32xf32> -> vector<16x32xf32>
    %c0_11 = arith.constant 0 : index
    %c0_12 = arith.constant 0 : index
    %c0_13 = arith.constant 0 : index
    %23 = vector.load %arg4[%c0_11, %c0_12, %c0_13] : memref<1x1x32xbf16, #tpu.memory_space<vmem>>, vector<1x1x32xbf16>
    %24 = vector.shape_cast %23 : vector<1x1x32xbf16> to vector<1x32xbf16>
    %25 = arith.extf %24 : vector<1x32xbf16> to vector<1x32xf32>
    %26 = vector.broadcast %25 : vector<1x32xf32> to vector<16x32xf32>
    %27 = arith.addf %22, %26 : vector<16x32xf32>
    %c0_14 = arith.constant 0 : index
    %c0_15 = arith.constant 0 : index
    %c0_16 = arith.constant 0 : index
    %28 = vector.load %arg5[%c0_14, %c0_15, %c0_16] : memref<1x32x32xbf16, #tpu.memory_space<vmem>>, vector<1x32x32xbf16>
    %29 = vector.shape_cast %28 : vector<1x32x32xbf16> to vector<32x32xbf16>
    %cst_17 = arith.constant dense<0.000000e+00> : vector<16x32xf32>
    %30 = tpu.matmul %19, %29, %cst_17 {dimension_numbers = #tpu.dot_dimension_numbers<[1], [0], [0], [1], [0, 0, 1, 1], [], []>} : vector<16x32xbf16>, vector<32x32xbf16>, vector<16x32xf32> -> vector<16x32xf32>
    %c0_18 = arith.constant 0 : index
    %c0_19 = arith.constant 0 : index
    %c0_20 = arith.constant 0 : index
    %31 = vector.load %arg6[%c0_18, %c0_19, %c0_20] : memref<1x1x32xbf16, #tpu.memory_space<vmem>>, vector<1x1x32xbf16>
    %32 = vector.shape_cast %31 : vector<1x1x32xbf16> to vector<1x32xbf16>
    %33 = arith.extf %32 : vector<1x32xbf16> to vector<1x32xf32>
    %34 = vector.broadcast %33 : vector<1x32xf32> to vector<16x32xf32>
    %35 = arith.addf %30, %34 : vector<16x32xf32>
    %c0_21 = arith.constant 0 : index
    %c0_22 = arith.constant 0 : index
    %c0_23 = arith.constant 0 : index
    %36 = vector.load %arg7[%c0_21, %c0_22, %c0_23] : memref<1x32x32xbf16, #tpu.memory_space<vmem>>, vector<1x32x32xbf16>
    %37 = vector.shape_cast %36 : vector<1x32x32xbf16> to vector<32x32xbf16>
    %cst_24 = arith.constant dense<0.000000e+00> : vector<16x32xf32>
    %38 = tpu.matmul %19, %37, %cst_24 {dimension_numbers = #tpu.dot_dimension_numbers<[1], [0], [0], [1], [0, 0, 1, 1], [], []>} : vector<16x32xbf16>, vector<32x32xbf16>, vector<16x32xf32> -> vector<16x32xf32>
    %c0_25 = arith.constant 0 : index
    %c0_26 = arith.constant 0 : index
    %c0_27 = arith.constant 0 : index
    %39 = vector.load %arg8[%c0_25, %c0_26, %c0_27] : memref<1x1x32xbf16, #tpu.memory_space<vmem>>, vector<1x1x32xbf16>
    %40 = vector.shape_cast %39 : vector<1x1x32xbf16> to vector<1x32xbf16>
    %41 = arith.extf %40 : vector<1x32xbf16> to vector<1x32xf32>
    %42 = vector.broadcast %41 : vector<1x32xf32> to vector<16x32xf32>
    %43 = arith.addf %38, %42 : vector<16x32xf32>
    %c0_28 = arith.constant 0 : index
    %c0_29 = arith.constant 0 : index
    %44 = vector.load %arg14[%c0_28, %c0_29] : memref<16x32xf32, #tpu.memory_space<vmem>>, vector<16x32xf32>
    %c0_30 = arith.constant 0 : index
    %c0_31 = arith.constant 0 : index
    %45 = vector.load %arg15[%c0_30, %c0_31] : memref<16x32xf32, #tpu.memory_space<vmem>>, vector<16x32xf32>
    %c0_32 = arith.constant 0 : index
    %c0_33 = arith.constant 0 : index
    %46 = vector.load %arg16[%c0_32, %c0_33] : memref<32x32xbf16, #tpu.memory_space<vmem>>, vector<32x32xbf16>
    %47 = arith.truncf %27 : vector<16x32xf32> to vector<16x32xbf16>
    %cst_34 = arith.constant dense<0.000000e+00> : vector<16x32xf32>
    %48 = tpu.matmul %47, %46, %cst_34 {dimension_numbers = #tpu.dot_dimension_numbers<[1], [0], [0], [1], [0, 0, 1, 1], [], []>} : vector<16x32xbf16>, vector<32x32xbf16>, vector<16x32xf32> -> vector<16x32xf32>
    %49 = arith.truncf %35 : vector<16x32xf32> to vector<16x32xbf16>
    %cst_35 = arith.constant dense<0.000000e+00> : vector<16x32xf32>
    %50 = tpu.matmul %49, %46, %cst_35 {dimension_numbers = #tpu.dot_dimension_numbers<[1], [0], [0], [1], [0, 0, 1, 1], [], []>} : vector<16x32xbf16>, vector<32x32xbf16>, vector<16x32xf32> -> vector<16x32xf32>
    %51 = arith.mulf %27, %44 : vector<16x32xf32>
    %52 = arith.mulf %48, %45 : vector<16x32xf32>
    %53 = arith.addf %51, %52 : vector<16x32xf32>
    %54 = arith.mulf %35, %44 : vector<16x32xf32>
    %55 = arith.mulf %50, %45 : vector<16x32xf32>
    %56 = arith.addf %54, %55 : vector<16x32xf32>
    %c0_36 = arith.constant 0 : index
    %c0_37 = arith.constant 0 : index
    %c0_38 = arith.constant 0 : index
    %57 = vector.load %arg17[%c0_36, %c0_37, %c0_38] : memref<4x1x32xf32, #tpu.memory_space<vmem>>, vector<1x1x32xf32>
    %58 = vector.shape_cast %57 : vector<1x1x32xf32> to vector<1x32xf32>
    %59 = vector.broadcast %58 : vector<1x32xf32> to vector<16x32xf32>
    %60 = arith.mulf %53, %59 : vector<16x32xf32>
    %c1 = arith.constant 1 : index
    %c0_39 = arith.constant 0 : index
    %c0_40 = arith.constant 0 : index
    %61 = vector.load %arg17[%c1, %c0_39, %c0_40] : memref<4x1x32xf32, #tpu.memory_space<vmem>>, vector<1x1x32xf32>
    %62 = vector.shape_cast %61 : vector<1x1x32xf32> to vector<1x32xf32>
    %63 = vector.broadcast %62 : vector<1x32xf32> to vector<16x32xf32>
    %64 = arith.mulf %53, %63 : vector<16x32xf32>
    %c2 = arith.constant 2 : index
    %c0_41 = arith.constant 0 : index
    %c0_42 = arith.constant 0 : index
    %65 = vector.load %arg17[%c2, %c0_41, %c0_42] : memref<4x1x32xf32, #tpu.memory_space<vmem>>, vector<1x1x32xf32>
    %66 = vector.shape_cast %65 : vector<1x1x32xf32> to vector<1x32xf32>
    %67 = vector.broadcast %66 : vector<1x32xf32> to vector<16x32xf32>
    %68 = arith.mulf %53, %67 : vector<16x32xf32>
    %c3 = arith.constant 3 : index
    %c0_43 = arith.constant 0 : index
    %c0_44 = arith.constant 0 : index
    %69 = vector.load %arg17[%c3, %c0_43, %c0_44] : memref<4x1x32xf32, #tpu.memory_space<vmem>>, vector<1x1x32xf32>
    %70 = vector.shape_cast %69 : vector<1x1x32xf32> to vector<1x32xf32>
    %71 = vector.broadcast %70 : vector<1x32xf32> to vector<16x32xf32>
    %72 = arith.mulf %53, %71 : vector<16x32xf32>
    %73 = tpu.concatenate %60, %64, %68, %72 in 0 : vector<16x32xf32>, vector<16x32xf32>, vector<16x32xf32>, vector<16x32xf32> -> vector<64x32xf32>
    %74 = arith.truncf %73 : vector<64x32xf32> to vector<64x32xbf16>
    %75 = arith.truncf %56 : vector<16x32xf32> to vector<16x32xbf16>
    %76 = arith.truncf %43 : vector<16x32xf32> to vector<16x32xbf16>
    %cst_45 = arith.constant dense<0.000000e+00> : vector<64x16xf32>
    %77 = tpu.matmul %74, %75, %cst_45 {dimension_numbers = #tpu.dot_dimension_numbers<[1], [1], [0], [0], [0, 0, 1, 0], [], []>} : vector<64x32xbf16>, vector<16x32xbf16>, vector<64x16xf32> -> vector<64x16xf32>
    %cst_46 = arith.constant 0.353553385 : f32
    %78 = vector.broadcast %cst_46 : f32 to vector<64x16xf32>
    %79 = arith.mulf %77, %78 : vector<64x16xf32>
    %c0_47 = arith.constant 0 : index
    %c0_48 = arith.constant 0 : index
    %80 = vector.load %arg18[%c0_47, %c0_48] : memref<64x16xf32, #tpu.memory_space<vmem>>, vector<64x16xf32>
    %81 = arith.addf %79, %80 : vector<64x16xf32>
    %cst_49 = arith.constant dense<0xFF800000> : vector<64xf32>
    %82 = vector.multi_reduction <maximumf>, %81, %cst_49 [1] : vector<64x16xf32> to vector<64xf32>
    %83 = vector.shape_cast %82 : vector<64xf32> to vector<64x1xf32>
    %84 = vector.broadcast %83 : vector<64x1xf32> to vector<64x16xf32>
    %85 = arith.subf %81, %84 : vector<64x16xf32>
    %86 = math.exp %85 : vector<64x16xf32>
    %cst_50 = arith.constant dense<0.000000e+00> : vector<64xf32>
    %87 = vector.multi_reduction <add>, %86, %cst_50 [1] : vector<64x16xf32> to vector<64xf32>
    %88 = vector.shape_cast %87 : vector<64xf32> to vector<64x1xf32>
    %89 = tpu.reciprocal %88 {approx = true} : vector<64x1xf32> -> vector<64x1xf32>
    %90 = vector.broadcast %89 : vector<64x1xf32> to vector<64x16xf32>
    %91 = arith.mulf %86, %90 : vector<64x16xf32>
    %92 = arith.truncf %91 : vector<64x16xf32> to vector<64x16xbf16>
    %cst_51 = arith.constant dense<0.000000e+00> : vector<64x32xf32>
    %93 = tpu.matmul %92, %76, %cst_51 {dimension_numbers = #tpu.dot_dimension_numbers<[1], [0], [0], [1], [0, 0, 1, 1], [], []>} : vector<64x16xbf16>, vector<16x32xbf16>, vector<64x32xf32> -> vector<64x32xf32>
    %cst_52 = arith.constant 0.000000e+00 : f32
    %94 = vector.broadcast %cst_52 : f32 to vector<16x32xf32>
    %95 = vector.extract_strided_slice %93 {offsets = [0, 0], sizes = [16, 32], strides = [1, 1]} : vector<64x32xf32> to vector<16x32xf32>
    %c0_53 = arith.constant 0 : index
    %c0_54 = arith.constant 0 : index
    %c0_55 = arith.constant 0 : index
    %96 = vector.load %arg17[%c0_53, %c0_54, %c0_55] : memref<4x1x32xf32, #tpu.memory_space<vmem>>, vector<1x1x32xf32>
    %97 = vector.shape_cast %96 : vector<1x1x32xf32> to vector<1x32xf32>
    %98 = vector.broadcast %97 : vector<1x32xf32> to vector<16x32xf32>
    %99 = arith.mulf %95, %98 : vector<16x32xf32>
    %100 = arith.addf %94, %99 : vector<16x32xf32>
    %101 = vector.extract_strided_slice %93 {offsets = [16, 0], sizes = [16, 32], strides = [1, 1]} : vector<64x32xf32> to vector<16x32xf32>
    %c1_56 = arith.constant 1 : index
    %c0_57 = arith.constant 0 : index
    %c0_58 = arith.constant 0 : index
    %102 = vector.load %arg17[%c1_56, %c0_57, %c0_58] : memref<4x1x32xf32, #tpu.memory_space<vmem>>, vector<1x1x32xf32>
    %103 = vector.shape_cast %102 : vector<1x1x32xf32> to vector<1x32xf32>
    %104 = vector.broadcast %103 : vector<1x32xf32> to vector<16x32xf32>
    %105 = arith.mulf %101, %104 : vector<16x32xf32>
    %106 = arith.addf %100, %105 : vector<16x32xf32>
    %107 = vector.extract_strided_slice %93 {offsets = [32, 0], sizes = [16, 32], strides = [1, 1]} : vector<64x32xf32> to vector<16x32xf32>
    %c2_59 = arith.constant 2 : index
    %c0_60 = arith.constant 0 : index
    %c0_61 = arith.constant 0 : index
    %108 = vector.load %arg17[%c2_59, %c0_60, %c0_61] : memref<4x1x32xf32, #tpu.memory_space<vmem>>, vector<1x1x32xf32>
    %109 = vector.shape_cast %108 : vector<1x1x32xf32> to vector<1x32xf32>
    %110 = vector.broadcast %109 : vector<1x32xf32> to vector<16x32xf32>
    %111 = arith.mulf %107, %110 : vector<16x32xf32>
    %112 = arith.addf %106, %111 : vector<16x32xf32>
    %113 = vector.extract_strided_slice %93 {offsets = [48, 0], sizes = [16, 32], strides = [1, 1]} : vector<64x32xf32> to vector<16x32xf32>
    %c3_62 = arith.constant 3 : index
    %c0_63 = arith.constant 0 : index
    %c0_64 = arith.constant 0 : index
    %114 = vector.load %arg17[%c3_62, %c0_63, %c0_64] : memref<4x1x32xf32, #tpu.memory_space<vmem>>, vector<1x1x32xf32>
    %115 = vector.shape_cast %114 : vector<1x1x32xf32> to vector<1x32xf32>
    %116 = vector.broadcast %115 : vector<1x32xf32> to vector<16x32xf32>
    %117 = arith.mulf %113, %116 : vector<16x32xf32>
    %118 = arith.addf %112, %117 : vector<16x32xf32>
    %119 = arith.truncf %118 : vector<16x32xf32> to vector<16x32xbf16>
    %c0_65 = arith.constant 0 : index
    %c0_66 = arith.constant 0 : index
    %c0_67 = arith.constant 0 : index
    %120 = vector.load %arg9[%c0_65, %c0_66, %c0_67] : memref<1x32x32xbf16, #tpu.memory_space<vmem>>, vector<1x32x32xbf16>
    %121 = vector.shape_cast %120 : vector<1x32x32xbf16> to vector<32x32xbf16>
    %cst_68 = arith.constant dense<0.000000e+00> : vector<16x32xf32>
    %122 = tpu.matmul %119, %121, %cst_68 {dimension_numbers = #tpu.dot_dimension_numbers<[1], [0], [0], [1], [0, 0, 1, 1], [], []>} : vector<16x32xbf16>, vector<32x32xbf16>, vector<16x32xf32> -> vector<16x32xf32>
    %123 = arith.addf %3, %122 : vector<16x32xf32>
    %c0_69 = arith.constant 0 : index
    %c0_70 = arith.constant 0 : index
    %c0_71 = arith.constant 0 : index
    %124 = vector.load %arg10[%c0_69, %c0_70, %c0_71] : memref<1x1x32xbf16, #tpu.memory_space<vmem>>, vector<1x1x32xbf16>
    %125 = vector.shape_cast %124 : vector<1x1x32xbf16> to vector<1x32xbf16>
    %126 = arith.extf %125 : vector<1x32xbf16> to vector<1x32xf32>
    %127 = arith.mulf %123, %123 : vector<16x32xf32>
    %cst_72 = arith.constant dense<0.000000e+00> : vector<16xf32>
    %128 = vector.multi_reduction <add>, %127, %cst_72 [1] : vector<16x32xf32> to vector<16xf32>
    %129 = vector.shape_cast %128 : vector<16xf32> to vector<16x1xf32>
    %cst_73 = arith.constant 3.200000e+01 : f32
    %130 = vector.broadcast %cst_73 : f32 to vector<16x1xf32>
    %131 = arith.divf %129, %130 : vector<16x1xf32>
    %cst_74 = arith.constant 9.99999997E-7 : f32
    %132 = vector.broadcast %cst_74 : f32 to vector<16x1xf32>
    %133 = arith.addf %131, %132 : vector<16x1xf32>
    %134 = math.rsqrt %133 : vector<16x1xf32>
    %135 = vector.broadcast %134 : vector<16x1xf32> to vector<16x32xf32>
    %136 = arith.mulf %123, %135 : vector<16x32xf32>
    %137 = vector.broadcast %126 : vector<1x32xf32> to vector<16x32xf32>
    %138 = arith.mulf %136, %137 : vector<16x32xf32>
    %139 = arith.truncf %138 : vector<16x32xf32> to vector<16x32xbf16>
    %c0_75 = arith.constant 0 : index
    %c0_76 = arith.constant 0 : index
    %c0_77 = arith.constant 0 : index
    %140 = vector.load %arg11[%c0_75, %c0_76, %c0_77] : memref<1x32x64xbf16, #tpu.memory_space<vmem>>, vector<1x32x64xbf16>
    %141 = vector.shape_cast %140 : vector<1x32x64xbf16> to vector<32x64xbf16>
    %cst_78 = arith.constant dense<0.000000e+00> : vector<16x64xf32>
    %142 = tpu.matmul %139, %141, %cst_78 {dimension_numbers = #tpu.dot_dimension_numbers<[1], [0], [0], [1], [0, 0, 1, 1], [], []>} : vector<16x32xbf16>, vector<32x64xbf16>, vector<16x64xf32> -> vector<16x64xf32>
    %c0_79 = arith.constant 0 : index
    %c0_80 = arith.constant 0 : index
    %c0_81 = arith.constant 0 : index
    %143 = vector.load %arg12[%c0_79, %c0_80, %c0_81] : memref<1x32x64xbf16, #tpu.memory_space<vmem>>, vector<1x32x64xbf16>
    %144 = vector.shape_cast %143 : vector<1x32x64xbf16> to vector<32x64xbf16>
    %cst_82 = arith.constant dense<0.000000e+00> : vector<16x64xf32>
    %145 = tpu.matmul %139, %144, %cst_82 {dimension_numbers = #tpu.dot_dimension_numbers<[1], [0], [0], [1], [0, 0, 1, 1], [], []>} : vector<16x32xbf16>, vector<32x64xbf16>, vector<16x64xf32> -> vector<16x64xf32>
    %146 = arith.negf %142 : vector<16x64xf32>
    %147 = math.exp %146 : vector<16x64xf32>
    %cst_83 = arith.constant 1.000000e+00 : f32
    %148 = vector.broadcast %cst_83 : f32 to vector<16x64xf32>
    %149 = arith.addf %148, %147 : vector<16x64xf32>
    %150 = arith.divf %148, %149 : vector<16x64xf32>
    %151 = arith.mulf %142, %150 : vector<16x64xf32>
    %152 = arith.mulf %151, %145 : vector<16x64xf32>
    %153 = arith.truncf %152 : vector<16x64xf32> to vector<16x64xbf16>
    %c0_84 = arith.constant 0 : index
    %c0_85 = arith.constant 0 : index
    %c0_86 = arith.constant 0 : index
    %154 = vector.load %arg13[%c0_84, %c0_85, %c0_86] : memref<1x64x32xbf16, #tpu.memory_space<vmem>>, vector<1x64x32xbf16>
    %155 = vector.shape_cast %154 : vector<1x64x32xbf16> to vector<64x32xbf16>
    %cst_87 = arith.constant dense<0.000000e+00> : vector<16x32xf32>
    %156 = tpu.matmul %153, %155, %cst_87 {dimension_numbers = #tpu.dot_dimension_numbers<[1], [0], [0], [1], [0, 0, 1, 1], [], []>} : vector<16x64xbf16>, vector<64x32xbf16>, vector<16x32xf32> -> vector<16x32xf32>
    %157 = arith.addf %123, %156 : vector<16x32xf32>
    %c0_88 = arith.constant 0 : index
    %c0_89 = arith.constant 0 : index
    %158 = vector.load %arg22[%c0_88, %c0_89] : memref<16x32xf32, #tpu.memory_space<vmem>>, vector<16x32xf32>
    tpu.vector_store %arg22[%c0_88, %c0_89], %157 {strides = array<i32>} : memref<16x32xf32, #tpu.memory_space<vmem>>, vector<16x32xf32>,
    %c1_i32 = arith.constant 1 : i32
    %159 = arith.cmpi eq, %arg0, %c1_i32 : i32
    %160 = arith.extui %159 : i1 to i32
    %c0_i32_90 = arith.constant 0 : i32
    %161 = arith.cmpi ne, %160, %c0_i32_90 : i32
    scf.if %161 {
      %c0_91 = arith.constant 0 : index
      %c0_92 = arith.constant 0 : index
      %162 = vector.load %arg22[%c0_91, %c0_92] : memref<16x32xf32, #tpu.memory_space<vmem>>, vector<16x32xf32>
      %163 = vector.extract_strided_slice %162 {offsets = [7, 0], sizes = [1, 32], strides = [1, 1]} : vector<16x32xf32> to vector<1x32xf32>
      %164 = vector.extract_strided_slice %162 {offsets = [15, 0], sizes = [1, 32], strides = [1, 1]} : vector<16x32xf32> to vector<1x32xf32>
      %165 = tpu.concatenate %163, %164 in 0 : vector<1x32xf32>, vector<1x32xf32> -> vector<2x32xf32>
      %c0_93 = arith.constant 0 : index
      %c0_94 = arith.constant 0 : index
      %166 = vector.load %arg19[%c0_93, %c0_94] : memref<1x32xbf16, #tpu.memory_space<vmem>>, vector<1x32xbf16>
      %167 = arith.extf %166 : vector<1x32xbf16> to vector<1x32xf32>
      %168 = arith.mulf %165, %165 : vector<2x32xf32>
      %cst_95 = arith.constant dense<0.000000e+00> : vector<2xf32>
      %169 = vector.multi_reduction <add>, %168, %cst_95 [1] : vector<2x32xf32> to vector<2xf32>
      %170 = vector.shape_cast %169 : vector<2xf32> to vector<2x1xf32>
      %cst_96 = arith.constant 3.200000e+01 : f32
      %171 = vector.broadcast %cst_96 : f32 to vector<2x1xf32>
      %172 = arith.divf %170, %171 : vector<2x1xf32>
      %cst_97 = arith.constant 9.99999997E-7 : f32
      %173 = vector.broadcast %cst_97 : f32 to vector<2x1xf32>
      %174 = arith.addf %172, %173 : vector<2x1xf32>
      %175 = math.rsqrt %174 : vector<2x1xf32>
      %176 = vector.broadcast %175 : vector<2x1xf32> to vector<2x32xf32>
      %177 = arith.mulf %165, %176 : vector<2x32xf32>
      %178 = vector.broadcast %167 : vector<1x32xf32> to vector<2x32xf32>
      %179 = arith.mulf %177, %178 : vector<2x32xf32>
      %180 = arith.truncf %179 : vector<2x32xf32> to vector<2x32xbf16>
      %c0_98 = arith.constant 0 : index
      %c0_99 = arith.constant 0 : index
      %181 = vector.load %arg20[%c0_98, %c0_99] : memref<32x128xbf16, #tpu.memory_space<vmem>>, vector<32x128xbf16>
      %cst_100 = arith.constant dense<0.000000e+00> : vector<2x128xf32>
      %182 = tpu.matmul %180, %181, %cst_100 {dimension_numbers = #tpu.dot_dimension_numbers<[1], [0], [0], [1], [0, 0, 1, 1], [], []>} : vector<2x32xbf16>, vector<32x128xbf16>, vector<2x128xf32> -> vector<2x128xf32>
      %c0_101 = arith.constant 0 : index
      %c0_102 = arith.constant 0 : index
      %183 = vector.load %arg21[%c0_101, %c0_102] : memref<2x128xf32, #tpu.memory_space<vmem>>, vector<2x128xf32>
      tpu.vector_store %arg21[%c0_101, %c0_102], %182 {strides = array<i32>} : memref<2x128xf32, #tpu.memory_space<vmem>>, vector<2x128xf32>,
    } else {
    }
    return
  }
  func.func @transform_0(%arg0: i32) -> (i32, i32) {
    %c0_i32 = arith.constant 0 : i32
    %c0_i32_0 = arith.constant 0 : i32
    %c0_i32_1 = arith.constant 0 : i32
    return %c0_i32, %c0_i32_0 : i32, i32
  }
  func.func @transform_1(%arg0: i32) -> (i32, i32, i32) {
    %c0_i32 = arith.constant 0 : i32
    %c0_i32_0 = arith.constant 0 : i32
    %c0_i32_1 = arith.constant 0 : i32
    return %arg0, %c0_i32, %c0_i32_0 : i32, i32, i32
  }
  func.func @transform_2(%arg0: i32) -> (i32, i32, i32) {
    %c0_i32 = arith.constant 0 : i32
    %c0_i32_0 = arith.constant 0 : i32
    %c0_i32_1 = arith.constant 0 : i32
    return %arg0, %c0_i32, %c0_i32_0 : i32, i32, i32
  }
  func.func @transform_3(%arg0: i32) -> (i32, i32, i32) {
    %c0_i32 = arith.constant 0 : i32
    %c0_i32_0 = arith.constant 0 : i32
    %c0_i32_1 = arith.constant 0 : i32
    return %arg0, %c0_i32, %c0_i32_0 : i32, i32, i32
  }
  func.func @transform_4(%arg0: i32) -> (i32, i32, i32) {
    %c0_i32 = arith.constant 0 : i32
    %c0_i32_0 = arith.constant 0 : i32
    %c0_i32_1 = arith.constant 0 : i32
    return %arg0, %c0_i32, %c0_i32_0 : i32, i32, i32
  }
  func.func @transform_5(%arg0: i32) -> (i32, i32, i32) {
    %c0_i32 = arith.constant 0 : i32
    %c0_i32_0 = arith.constant 0 : i32
    %c0_i32_1 = arith.constant 0 : i32
    return %arg0, %c0_i32, %c0_i32_0 : i32, i32, i32
  }
  func.func @transform_6(%arg0: i32) -> (i32, i32, i32) {
    %c0_i32 = arith.constant 0 : i32
    %c0_i32_0 = arith.constant 0 : i32
    %c0_i32_1 = arith.constant 0 : i32
    return %arg0, %c0_i32, %c0_i32_0 : i32, i32, i32
  }
  func.func @transform_7(%arg0: i32) -> (i32, i32, i32) {
    %c0_i32 = arith.constant 0 : i32
    %c0_i32_0 = arith.constant 0 : i32
    %c0_i32_1 = arith.constant 0 : i32
    return %arg0, %c0_i32, %c0_i32_0 : i32, i32, i32
  }
  func.func @transform_8(%arg0: i32) -> (i32, i32, i32) {
    %c0_i32 = arith.constant 0 : i32
    %c0_i32_0 = arith.constant 0 : i32
    %c0_i32_1 = arith.constant 0 : i32
    return %arg0, %c0_i32, %c0_i32_0 : i32, i32, i32
  }
  func.func @transform_9(%arg0: i32) -> (i32, i32, i32) {
    %c0_i32 = arith.constant 0 : i32
    %c0_i32_0 = arith.constant 0 : i32
    %c0_i32_1 = arith.constant 0 : i32
    return %arg0, %c0_i32, %c0_i32_0 : i32, i32, i32
  }
  func.func @transform_10(%arg0: i32) -> (i32, i32, i32) {
    %c0_i32 = arith.constant 0 : i32
    %c0_i32_0 = arith.constant 0 : i32
    %c0_i32_1 = arith.constant 0 : i32
    return %arg0, %c0_i32, %c0_i32_0 : i32, i32, i32
  }
  func.func @transform_11(%arg0: i32) -> (i32, i32, i32) {
    %c0_i32 = arith.constant 0 : i32
    %c0_i32_0 = arith.constant 0 : i32
    %c0_i32_1 = arith.constant 0 : i32
    return %arg0, %c0_i32, %c0_i32_0 : i32, i32, i32
  }
  func.func @transform_12(%arg0: i32) -> (i32, i32, i32) {
    %c0_i32 = arith.constant 0 : i32
    %c0_i32_0 = arith.constant 0 : i32
    %c0_i32_1 = arith.constant 0 : i32
    return %arg0, %c0_i32, %c0_i32_0 : i32, i32, i32
  }
  func.func @transform_13(%arg0: i32) -> (i32, i32) {
    %c0_i32 = arith.constant 0 : i32
    %c0_i32_0 = arith.constant 0 : i32
    %c0_i32_1 = arith.constant 0 : i32
    return %c0_i32, %c0_i32_0 : i32, i32
  }
  func.func @transform_14(%arg0: i32) -> (i32, i32) {
    %c0_i32 = arith.constant 0 : i32
    %c0_i32_0 = arith.constant 0 : i32
    %c0_i32_1 = arith.constant 0 : i32
    return %c0_i32, %c0_i32_0 : i32, i32
  }
  func.func @transform_15(%arg0: i32) -> (i32, i32) {
    %c0_i32 = arith.constant 0 : i32
    %c0_i32_0 = arith.constant 0 : i32
    %c0_i32_1 = arith.constant 0 : i32
    return %c0_i32, %c0_i32_0 : i32, i32
  }
  func.func @transform_16(%arg0: i32) -> (i32, i32, i32) {
    %c0_i32 = arith.constant 0 : i32
    %c0_i32_0 = arith.constant 0 : i32
    %c0_i32_1 = arith.constant 0 : i32
    %c0_i32_2 = arith.constant 0 : i32
    return %c0_i32, %c0_i32_0, %c0_i32_1 : i32, i32, i32
  }
  func.func @transform_17(%arg0: i32) -> (i32, i32) {
    %c0_i32 = arith.constant 0 : i32
    %c0_i32_0 = arith.constant 0 : i32
    %c0_i32_1 = arith.constant 0 : i32
    return %c0_i32, %c0_i32_0 : i32, i32
  }
  func.func @transform_18(%arg0: i32) -> (i32, i32) {
    %c0_i32 = arith.constant 0 : i32
    %c0_i32_0 = arith.constant 0 : i32
    %c0_i32_1 = arith.constant 0 : i32
    return %c0_i32, %c0_i32_0 : i32, i32
  }
  func.func @transform_19(%arg0: i32) -> (i32, i32) {
    %c0_i32 = arith.constant 0 : i32
    %c0_i32_0 = arith.constant 0 : i32
    %c0_i32_1 = arith.constant 0 : i32
    return %c0_i32, %c0_i32_0 : i32, i32
  }
  func.func @transform_20(%arg0: i32) -> (i32, i32) {
    %c0_i32 = arith.constant 0 : i32
    %c0_i32_0 = arith.constant 0 : i32
    %c0_i32_1 = arith.constant 0 : i32
    return %c0_i32, %c0_i32_0 : i32, i32
  }
}

</mosaic_0001>

<llo_original>
// kernel: tpu_custom_call.1
$region0: #{tpu_custom_call.1}
  #allocation0 [shape = 'u32[]', space=smem, size = 0x4, offset = 0x4, fixed_abs, tag = 'smem constant byte address 0x4 - core index']
  #allocation1 [shape = 'u32[72,128]{1,0:T(1,128)}', space=vmem, size = 0x9000, scoped, tag = 'internal scratch']
  #allocation2 [shape = 'f32[16,32]{1,0:T(8,128)}', space=vmem, size = 0x2000, scoped, tag = 'scratch operand']
  %s0 = inlined_call_operand.hbm [shape: bf16[16,32], index: 0, kind: input, shape index: {}]
  %s1 = inlined_call_operand.vmem [shape: bf16[2,1,32], index: 1, kind: input, shape index: {}]
  %s2 = inlined_call_operand.vmem [shape: bf16[2,32,32], index: 2, kind: input, shape index: {}]
  %s3 = inlined_call_operand.vmem [shape: bf16[2,1,32], index: 3, kind: input, shape index: {}]
  %s4 = inlined_call_operand.vmem [shape: bf16[2,32,32], index: 4, kind: input, shape index: {}]
  %s5 = inlined_call_operand.vmem [shape: bf16[2,1,32], index: 5, kind: input, shape index: {}]
  %s6 = inlined_call_operand.vmem [shape: bf16[2,32,32], index: 6, kind: input, shape index: {}]
  %s7 = inlined_call_operand.vmem [shape: bf16[2,1,32], index: 7, kind: input, shape index: {}]
  %s8 = inlined_call_operand.vmem [shape: bf16[2,32,32], index: 8, kind: input, shape index: {}]
  %s9 = inlined_call_operand.vmem [shape: bf16[2,1,32], index: 9, kind: input, shape index: {}]
  %s10 = inlined_call_operand.vmem [shape: bf16[2,32,64], index: 10, kind: input, shape index: {}]
  %s11 = inlined_call_operand.hbm [shape: bf16[2,32,64], index: 11, kind: input, shape index: {}]
  %s12 = inlined_call_operand.vmem [shape: bf16[2,64,32], index: 12, kind: input, shape index: {}]
  %s13 = inlined_call_operand.hbm [shape: f32[16,32], index: 13, kind: input, shape index: {}]
  %s14 = inlined_call_operand.hbm [shape: f32[16,32], index: 14, kind: input, shape index: {}]
  %s15 = inlined_call_operand.vmem [shape: bf16[32,32], index: 15, kind: input, shape index: {}]
  %s16 = inlined_call_operand.vmem [shape: f32[4,1,32], index: 16, kind: input, shape index: {}]
  %s17 = inlined_call_operand.vmem [shape: f32[64,16], index: 17, kind: input, shape index: {}]
  %s18 = inlined_call_operand.vmem [shape: bf16[1,32], index: 18, kind: input, shape index: {}]
  %s19 = inlined_call_operand.hbm [shape: bf16[32,128], index: 19, kind: input, shape index: {}]
  %s20 = inlined_call_operand.hbm [shape: f32[2,128], index: 20, kind: output, shape index: {}]
  %s21 = sld [smem:[#allocation0]]
  $region141: #{tpu_custom_call.1} parent=0
    _
  %s23 = ssub.s32 1, %s21
  %s24 = scalar_select 0, %s23, %s21
  $region1: #{tpu_custom_call.1} parent=0
    #allocation3 [shape = 'u8[4096]{0}', space=vmem, size = 0x1000, scoped, tag = 'input window, operand 0, single buffered']
    #allocation4 [shape = 's32[2]{0}', space=sflag, size = 0x8, scoped, tag = 'scoped memory for tpu_custom_call.1']
    #allocation5 [shape = 's32[2]{0}', space=sflag, size = 0x8, scoped, tag = 'scoped memory for tpu_custom_call.1']
    #allocation6 [shape = 'u8[16384]{0}', space=vmem, size = 0x4000, scoped, tag = 'input window, operand 11']
    #allocation7 [shape = 's32[2]{0}', space=sflag, size = 0x8, scoped, tag = 'scoped memory for tpu_custom_call.1']
    #allocation8 [shape = 'u8[8192]{0}', space=vmem, size = 0x2000, scoped, tag = 'input window, operand 13, single buffered']
    #allocation9 [shape = 'u8[8192]{0}', space=vmem, size = 0x2000, scoped, tag = 'input window, operand 14, single buffered']
    #allocation10 [shape = 's32[1]{0}', space=sflag, size = 0x4, scoped, tag = 'scoped memory for tpu_custom_call.1']
    #allocation11 [shape = 'u8[8192]{0}', space=vmem, size = 0x2000, scoped, tag = 'input window, operand 19, single buffered']
    #allocation12 [shape = 'u8[1024]{0}', space=vmem, size = 0x400, scoped, tag = 'output window, operand 0, single buffered']
    %25 = vsyncpa [#allocation4], 0
    %26 = vsyncpa [#allocation7], 0
    %s27 = scalar_lea.sflag [#allocation7], 1
    %28 = vsyncpa %s27, 0
    %29 = vsyncpa [#allocation10], 0
    %30 = vsyncpa [#allocation5], 0
    loop: start=0, step=1, limit=4
    $region2: #{tpu_custom_call.1} parent=1 // loop_pre_header
      _
    $region3: #{tpu_custom_call.1} parent=1 // loop_header
      %s32 = sphi 0, %s36
      %p33 = scmp.ge.s32.totalorder %s32, 4
      %s40 = sphi 0, %s40
      %s42 = sphi 0, %s40
      %s43 = sphi 0, %s42
      %s57 = sphi 0, %s43
      %s63 = sphi 0, %s65
      %s66 = sphi 0, %s63
      %s67 = sphi 0, %s66
      %s83 = sphi 0, %s67
      %s89 = sphi 0, %s91
      %s92 = sphi 0, %s89
      %s93 = sphi 0, %s92
      %s109 = sphi 0, %s93
      %s115 = sphi 0, %s117
      %s118 = sphi 0, %s115
      %s119 = sphi 0, %s118
      %s135 = sphi 0, %s119
      %s141 = sphi 0, %s143
      %s144 = sphi 0, %s141
      %s145 = sphi 0, %s144
      %s161 = sphi 0, %s145
      %s167 = sphi 0, %s169
      %s170 = sphi 0, %s167
      %s171 = sphi 0, %s170
      %s187 = sphi 0, %s171
      %s193 = sphi 0, %s195
      %s196 = sphi 0, %s193
      %s197 = sphi 0, %s196
      %s213 = sphi 0, %s197
      %s219 = sphi 0, %s221
      %s222 = sphi 0, %s219
      %s223 = sphi 0, %s222
      %s239 = sphi 0, %s223
      %s245 = sphi 0, %s247
      %s248 = sphi 0, %s245
      %s249 = sphi 0, %s248
      %s265 = sphi 0, %s249
      %s271 = sphi 0, %s273
      %s274 = sphi 0, %s271
      %s275 = sphi 0, %s274
      %s291 = sphi 0, %s275
      %s297 = sphi 0, %s299
      %s300 = sphi 0, %s297
      %s301 = sphi 0, %s300
      %s317 = sphi 0, %s301
      %s323 = sphi 0, %s325
      %s326 = sphi 0, %s323
      %s327 = sphi 0, %s326
      %s343 = sphi 0, %s327
      %s349 = sphi 0, %s351
      %s352 = sphi 0, %s349
      %s353 = sphi 0, %s352
      %s369 = sphi 0, %s353
      %s373 = sphi 0, %s373
      %s375 = sphi 0, %s373
      %s376 = sphi 0, %s375
      %s390 = sphi 0, %s376
      %s394 = sphi 0, %s394
      %s396 = sphi 0, %s394
      %s397 = sphi 0, %s396
      %s411 = sphi 0, %s397
      %s415 = sphi 0, %s415
      %s417 = sphi 0, %s415
      %s418 = sphi 0, %s417
      %s432 = sphi 0, %s418
      %s436 = sphi 0, %s436
      %s438 = sphi 0, %s436
      %s439 = sphi 0, %s438
      %s453 = sphi 0, %s439
      %s457 = sphi 0, %s457
      %s459 = sphi 0, %s457
      %s460 = sphi 0, %s459
      %s474 = sphi 0, %s460
      %s478 = sphi 0, %s478
      %s480 = sphi 0, %s478
      %s481 = sphi 0, %s480
      %s495 = sphi 0, %s481
      %s499 = sphi 0, %s499
      %s501 = sphi 0, %s499
      %s502 = sphi 0, %s501
      %s516 = sphi 0, %s502
      %s520 = sphi 0, %s520
      %s522 = sphi 0, %s520
      %s523 = sphi 0, %s522
      %s537 = sphi 0, %s523
    $region4: #{tpu_custom_call.1} parent=1 // loop_header_branch
      %35 = sbr.rel (%p33) target = $region8
    $region5: #{tpu_custom_call.1} parent=1 // loop_body
      %s37 = ssub.s32 %s32, 1
      %s38 = ssub.s32 %s32, 2
      %s39 = sadd.s32 %s32, 1
      %s41 = sadd.s32 %s40, 1
      %p44 = scmp.eq.s32.totalorder %s32, 1
      %p45 = scmp.ne.s32.totalorder %s40, %s42
      %p46 = scmp.eq.s32.totalorder %s32, 0
      %p47 = por %p45, %p46
      %p48 = scmp.ne.s32.totalorder %s40, %s42
      %p49 = scmp.eq.s32.totalorder %s37, 1
      %p50 = por %p48, %p49
      %p51 = scmp.ne.s32.totalorder %s42, %s43
      %p52 = scmp.eq.s32.totalorder %s37, 0
      %p53 = por %p51, %p52
      %p54 = scmp.ne.s32.totalorder %s42, %s43
      %p55 = scmp.eq.s32.totalorder %s38, 1
      %p56 = por %p54, %p55
      %p58 = scmp.ne.s32.totalorder %s43, %s57
      %p59 = scmp.eq.s32.totalorder %s38, 0
      %p60 = por %p58, %p59
      %s61 = ssub.s32 %s32, %s39
      %p62 = scmp.eq.s32.totalorder %s61, 0
      %s64 = sadd.s32 %s63, 1
      %s65 = scalar_select %p62, %s63, %s64
      %p68 = pneg %p62
      %p69 = scmp.eq.s32.totalorder %s32, 1
      %p70 = por %p68, %p69
      %p71 = scmp.ne.s32.totalorder %s63, %s66
      %p72 = scmp.eq.s32.totalorder %s32, 0
      %p73 = por %p71, %p72
      %p74 = scmp.ne.s32.totalorder %s63, %s66
      %p75 = scmp.eq.s32.totalorder %s37, 1
      %p76 = por %p74, %p75
      %p77 = scmp.ne.s32.totalorder %s66, %s67
      %p78 = scmp.eq.s32.totalorder %s37, 0
      %p79 = por %p77, %p78
      %p80 = scmp.ne.s32.totalorder %s66, %s67
      %p81 = scmp.eq.s32.totalorder %s38, 1
      %p82 = por %p80, %p81
      %p84 = scmp.ne.s32.totalorder %s67, %s83
      %p85 = scmp.eq.s32.totalorder %s38, 0
      %p86 = por %p84, %p85
      %s87 = ssub.s32 %s32, %s39
      %p88 = scmp.eq.s32.totalorder %s87, 0
      %s90 = sadd.s32 %s89, 1
      %s91 = scalar_select %p88, %s89, %s90
      %p94 = pneg %p88
      %p95 = scmp.eq.s32.totalorder %s32, 1
      %p96 = por %p94, %p95
      %p97 = scmp.ne.s32.totalorder %s89, %s92
      %p98 = scmp.eq.s32.totalorder %s32, 0
      %p99 = por %p97, %p98
      %p100 = scmp.ne.s32.totalorder %s89, %s92
      %p101 = scmp.eq.s32.totalorder %s37, 1
      %p102 = por %p100, %p101
      %p103 = scmp.ne.s32.totalorder %s92, %s93
      %p104 = scmp.eq.s32.totalorder %s37, 0
      %p105 = por %p103, %p104
      %p106 = scmp.ne.s32.totalorder %s92, %s93
      %p107 = scmp.eq.s32.totalorder %s38, 1
      %p108 = por %p106, %p107
      %p110 = scmp.ne.s32.totalorder %s93, %s109
      %p111 = scmp.eq.s32.totalorder %s38, 0
      %p112 = por %p110, %p111
      %s113 = ssub.s32 %s32, %s39
      %p114 = scmp.eq.s32.totalorder %s113, 0
      %s116 = sadd.s32 %s115, 1
      %s117 = scalar_select %p114, %s115, %s116
      %p120 = pneg %p114
      %p121 = scmp.eq.s32.totalorder %s32, 1
      %p122 = por %p120, %p121
      %p123 = scmp.ne.s32.totalorder %s115, %s118
      %p124 = scmp.eq.s32.totalorder %s32, 0
      %p125 = por %p123, %p124
      %p126 = scmp.ne.s32.totalorder %s115, %s118
      %p127 = scmp.eq.s32.totalorder %s37, 1
      %p128 = por %p126, %p127
      %p129 = scmp.ne.s32.totalorder %s118, %s119
      %p130 = scmp.eq.s32.totalorder %s37, 0
      %p131 = por %p129, %p130
      %p132 = scmp.ne.s32.totalorder %s118, %s119
      %p133 = scmp.eq.s32.totalorder %s38, 1
      %p134 = por %p132, %p133
      %p136 = scmp.ne.s32.totalorder %s119, %s135
      %p137 = scmp.eq.s32.totalorder %s38, 0
      %p138 = por %p136, %p137
      %s139 = ssub.s32 %s32, %s39
      %p140 = scmp.eq.s32.totalorder %s139, 0
      %s142 = sadd.s32 %s141, 1
      %s143 = scalar_select %p140, %s141, %s142
      %p146 = pneg %p140
      %p147 = scmp.eq.s32.totalorder %s32, 1
      %p148 = por %p146, %p147
      %p149 = scmp.ne.s32.totalorder %s141, %s144
      %p150 = scmp.eq.s32.totalorder %s32, 0
      %p151 = por %p149, %p150
      %p152 = scmp.ne.s32.totalorder %s141, %s144
      %p153 = scmp.eq.s32.totalorder %s37, 1
      %p154 = por %p152, %p153
      %p155 = scmp.ne.s32.totalorder %s144, %s145
      %p156 = scmp.eq.s32.totalorder %s37, 0
      %p157 = por %p155, %p156
      %p158 = scmp.ne.s32.totalorder %s144, %s145
      %p159 = scmp.eq.s32.totalorder %s38, 1
      %p160 = por %p158, %p159
      %p162 = scmp.ne.s32.totalorder %s145, %s161
      %p163 = scmp.eq.s32.totalorder %s38, 0
      %p164 = por %p162, %p163
      %s165 = ssub.s32 %s32, %s39
      %p166 = scmp.eq.s32.totalorder %s165, 0
      %s168 = sadd.s32 %s167, 1
      %s169 = scalar_select %p166, %s167, %s168
      %p172 = pneg %p166
      %p173 = scmp.eq.s32.totalorder %s32, 1
      %p174 = por %p172, %p173
      %p175 = scmp.ne.s32.totalorder %s167, %s170
      %p176 = scmp.eq.s32.totalorder %s32, 0
      %p177 = por %p175, %p176
      %p178 = scmp.ne.s32.totalorder %s167, %s170
      %p179 = scmp.eq.s32.totalorder %s37, 1
      %p180 = por %p178, %p179
      %p181 = scmp.ne.s32.totalorder %s170, %s171
      %p182 = scmp.eq.s32.totalorder %s37, 0
      %p183 = por %p181, %p182
      %p184 = scmp.ne.s32.totalorder %s170, %s171
      %p185 = scmp.eq.s32.totalorder %s38, 1
      %p186 = por %p184, %p185
      %p188 = scmp.ne.s32.totalorder %s171, %s187
      %p189 = scmp.eq.s32.totalorder %s38, 0
      %p190 = por %p188, %p189
      %s191 = ssub.s32 %s32, %s39
      %p192 = scmp.eq.s32.totalorder %s191, 0
      %s194 = sadd.s32 %s193, 1
      %s195 = scalar_select %p192, %s193, %s194
      %p198 = pneg %p192
      %p199 = scmp.eq.s32.totalorder %s32, 1
      %p200 = por %p198, %p199
      %p201 = scmp.ne.s32.totalorder %s193, %s196
      %p202 = scmp.eq.s32.totalorder %s32, 0
      %p203 = por %p201, %p202
      %p204 = scmp.ne.s32.totalorder %s193, %s196
      %p205 = scmp.eq.s32.totalorder %s37, 1
      %p206 = por %p204, %p205
      %p207 = scmp.ne.s32.totalorder %s196, %s197
      %p208 = scmp.eq.s32.totalorder %s37, 0
      %p209 = por %p207, %p208
      %p210 = scmp.ne.s32.totalorder %s196, %s197
      %p211 = scmp.eq.s32.totalorder %s38, 1
      %p212 = por %p210, %p211
      %p214 = scmp.ne.s32.totalorder %s197, %s213
      %p215 = scmp.eq.s32.totalorder %s38, 0
      %p216 = por %p214, %p215
      %s217 = ssub.s32 %s32, %s39
      %p218 = scmp.eq.s32.totalorder %s217, 0
      %s220 = sadd.s32 %s219, 1
      %s221 = scalar_select %p218, %s219, %s220
      %p224 = pneg %p218
      %p225 = scmp.eq.s32.totalorder %s32, 1
      %p226 = por %p224, %p225
      %p227 = scmp.ne.s32.totalorder %s219, %s222
      %p228 = scmp.eq.s32.totalorder %s32, 0
      %p229 = por %p227, %p228
      %p230 = scmp.ne.s32.totalorder %s219, %s222
      %p231 = scmp.eq.s32.totalorder %s37, 1
      %p232 = por %p230, %p231
      %p233 = scmp.ne.s32.totalorder %s222, %s223
      %p234 = scmp.eq.s32.totalorder %s37, 0
      %p235 = por %p233, %p234
      %p236 = scmp.ne.s32.totalorder %s222, %s223
      %p237 = scmp.eq.s32.totalorder %s38, 1
      %p238 = por %p236, %p237
      %p240 = scmp.ne.s32.totalorder %s223, %s239
      %p241 = scmp.eq.s32.totalorder %s38, 0
      %p242 = por %p240, %p241
      %s243 = ssub.s32 %s32, %s39
      %p244 = scmp.eq.s32.totalorder %s243, 0
      %s246 = sadd.s32 %s245, 1
      %s247 = scalar_select %p244, %s245, %s246
      %p250 = pneg %p244
      %p251 = scmp.eq.s32.totalorder %s32, 1
      %p252 = por %p250, %p251
      %p253 = scmp.ne.s32.totalorder %s245, %s248
      %p254 = scmp.eq.s32.totalorder %s32, 0
      %p255 = por %p253, %p254
      %p256 = scmp.ne.s32.totalorder %s245, %s248
      %p257 = scmp.eq.s32.totalorder %s37, 1
      %p258 = por %p256, %p257
      %p259 = scmp.ne.s32.totalorder %s248, %s249
      %p260 = scmp.eq.s32.totalorder %s37, 0
      %p261 = por %p259, %p260
      %p262 = scmp.ne.s32.totalorder %s248, %s249
      %p263 = scmp.eq.s32.totalorder %s38, 1
      %p264 = por %p262, %p263
      %p266 = scmp.ne.s32.totalorder %s249, %s265
      %p267 = scmp.eq.s32.totalorder %s38, 0
      %p268 = por %p266, %p267
      %s269 = ssub.s32 %s32, %s39
      %p270 = scmp.eq.s32.totalorder %s269, 0
      %s272 = sadd.s32 %s271, 1
      %s273 = scalar_select %p270, %s271, %s272
      %p276 = pneg %p270
      %p277 = scmp.eq.s32.totalorder %s32, 1
      %p278 = por %p276, %p277
      %p279 = scmp.ne.s32.totalorder %s271, %s274
      %p280 = scmp.eq.s32.totalorder %s32, 0
      %p281 = por %p279, %p280
      %p282 = scmp.ne.s32.totalorder %s271, %s274
      %p283 = scmp.eq.s32.totalorder %s37, 1
      %p284 = por %p282, %p283
      %p285 = scmp.ne.s32.totalorder %s274, %s275
      %p286 = scmp.eq.s32.totalorder %s37, 0
      %p287 = por %p285, %p286
      %p288 = scmp.ne.s32.totalorder %s274, %s275
      %p289 = scmp.eq.s32.totalorder %s38, 1
      %p290 = por %p288, %p289
      %p292 = scmp.ne.s32.totalorder %s275, %s291
      %p293 = scmp.eq.s32.totalorder %s38, 0
      %p294 = por %p292, %p293
      %s295 = ssub.s32 %s32, %s39
      %p296 = scmp.eq.s32.totalorder %s295, 0
      %s298 = sadd.s32 %s297, 1
      %s299 = scalar_select %p296, %s297, %s298
      %p302 = pneg %p296
      %p303 = scmp.eq.s32.totalorder %s32, 1
      %p304 = por %p302, %p303
      %p305 = scmp.ne.s32.totalorder %s297, %s300
      %p306 = scmp.eq.s32.totalorder %s32, 0
      %p307 = por %p305, %p306
      %p308 = scmp.ne.s32.totalorder %s297, %s300
      %p309 = scmp.eq.s32.totalorder %s37, 1
      %p310 = por %p308, %p309
      %p311 = scmp.ne.s32.totalorder %s300, %s301
      %p312 = scmp.eq.s32.totalorder %s37, 0
      %p313 = por %p311, %p312
      %p314 = scmp.ne.s32.totalorder %s300, %s301
      %p315 = scmp.eq.s32.totalorder %s38, 1
      %p316 = por %p314, %p315
      %p318 = scmp.ne.s32.totalorder %s301, %s317
      %p319 = scmp.eq.s32.totalorder %s38, 0
      %p320 = por %p318, %p319
      %s321 = ssub.s32 %s32, %s39
      %p322 = scmp.eq.s32.totalorder %s321, 0
      %s324 = sadd.s32 %s323, 1
      %s325 = scalar_select %p322, %s323, %s324
      %p328 = pneg %p322
      %p329 = scmp.eq.s32.totalorder %s32, 1
      %p330 = por %p328, %p329
      %p331 = scmp.ne.s32.totalorder %s323, %s326
      %p332 = scmp.eq.s32.totalorder %s32, 0
      %p333 = por %p331, %p332
      %p334 = scmp.ne.s32.totalorder %s323, %s326
      %p335 = scmp.eq.s32.totalorder %s37, 1
      %p336 = por %p334, %p335
      %p337 = scmp.ne.s32.totalorder %s326, %s327
      %p338 = scmp.eq.s32.totalorder %s37, 0
      %p339 = por %p337, %p338
      %p340 = scmp.ne.s32.totalorder %s326, %s327
      %p341 = scmp.eq.s32.totalorder %s38, 1
      %p342 = por %p340, %p341
      %p344 = scmp.ne.s32.totalorder %s327, %s343
      %p345 = scmp.eq.s32.totalorder %s38, 0
      %p346 = por %p344, %p345
      %s347 = ssub.s32 %s32, %s39
      %p348 = scmp.eq.s32.totalorder %s347, 0
      %s350 = sadd.s32 %s349, 1
      %s351 = scalar_select %p348, %s349, %s350
      %p354 = pneg %p348
      %p355 = scmp.eq.s32.totalorder %s32, 1
      %p356 = por %p354, %p355
      %p357 = scmp.ne.s32.totalorder %s349, %s352
      %p358 = scmp.eq.s32.totalorder %s32, 0
      %p359 = por %p357, %p358
      %p360 = scmp.ne.s32.totalorder %s349, %s352
      %p361 = scmp.eq.s32.totalorder %s37, 1
      %p362 = por %p360, %p361
      %p363 = scmp.ne.s32.totalorder %s352, %s353
      %p364 = scmp.eq.s32.totalorder %s37, 0
      %p365 = por %p363, %p364
      %p366 = scmp.ne.s32.totalorder %s352, %s353
      %p367 = scmp.eq.s32.totalorder %s38, 1
      %p368 = por %p366, %p367
      %p370 = scmp.ne.s32.totalorder %s353, %s369
      %p371 = scmp.eq.s32.totalorder %s38, 0
      %p372 = por %p370, %p371
      %s374 = sadd.s32 %s373, 1
      %p377 = scmp.eq.s32.totalorder %s32, 1
      %p378 = scmp.ne.s32.totalorder %s373, %s375
      %p379 = scmp.eq.s32.totalorder %s32, 0
      %p380 = por %p378, %p379
      %p381 = scmp.ne.s32.totalorder %s373, %s375
      %p382 = scmp.eq.s32.totalorder %s37, 1
      %p383 = por %p381, %p382
      %p384 = scmp.ne.s32.totalorder %s375, %s376
      %p385 = scmp.eq.s32.totalorder %s37, 0
      %p386 = por %p384, %p385
      %p387 = scmp.ne.s32.totalorder %s375, %s376
      %p388 = scmp.eq.s32.totalorder %s38, 1
      %p389 = por %p387, %p388
      %p391 = scmp.ne.s32.totalorder %s376, %s390
      %p392 = scmp.eq.s32.totalorder %s38, 0
      %p393 = por %p391, %p392
      %s395 = sadd.s32 %s394, 1
      %p398 = scmp.eq.s32.totalorder %s32, 1
      %p399 = scmp.ne.s32.totalorder %s394, %s396
      %p400 = scmp.eq.s32.totalorder %s32, 0
      %p401 = por %p399, %p400
      %p402 = scmp.ne.s32.totalorder %s394, %s396
      %p403 = scmp.eq.s32.totalorder %s37, 1
      %p404 = por %p402, %p403
      %p405 = scmp.ne.s32.totalorder %s396, %s397
      %p406 = scmp.eq.s32.totalorder %s37, 0
      %p407 = por %p405, %p406
      %p408 = scmp.ne.s32.totalorder %s396, %s397
      %p409 = scmp.eq.s32.totalorder %s38, 1
      %p410 = por %p408, %p409
      %p412 = scmp.ne.s32.totalorder %s397, %s411
      %p413 = scmp.eq.s32.totalorder %s38, 0
      %p414 = por %p412, %p413
      %s416 = sadd.s32 %s415, 1
      %p419 = scmp.eq.s32.totalorder %s32, 1
      %p420 = scmp.ne.s32.totalorder %s415, %s417
      %p421 = scmp.eq.s32.totalorder %s32, 0
      %p422 = por %p420, %p421
      %p423 = scmp.ne.s32.totalorder %s415, %s417
      %p424 = scmp.eq.s32.totalorder %s37, 1
      %p425 = por %p423, %p424
      %p426 = scmp.ne.s32.totalorder %s417, %s418
      %p427 = scmp.eq.s32.totalorder %s37, 0
      %p428 = por %p426, %p427
      %p429 = scmp.ne.s32.totalorder %s417, %s418
      %p430 = scmp.eq.s32.totalorder %s38, 1
      %p431 = por %p429, %p430
      %p433 = scmp.ne.s32.totalorder %s418, %s432
      %p434 = scmp.eq.s32.totalorder %s38, 0
      %p435 = por %p433, %p434
      %s437 = sadd.s32 %s436, 1
      %p440 = scmp.eq.s32.totalorder %s32, 1
      %p441 = scmp.ne.s32.totalorder %s436, %s438
      %p442 = scmp.eq.s32.totalorder %s32, 0
      %p443 = por %p441, %p442
      %p444 = scmp.ne.s32.totalorder %s436, %s438
      %p445 = scmp.eq.s32.totalorder %s37, 1
      %p446 = por %p444, %p445
      %p447 = scmp.ne.s32.totalorder %s438, %s439
      %p448 = scmp.eq.s32.totalorder %s37, 0
      %p449 = por %p447, %p448
      %p450 = scmp.ne.s32.totalorder %s438, %s439
      %p451 = scmp.eq.s32.totalorder %s38, 1
      %p452 = por %p450, %p451
      %p454 = scmp.ne.s32.totalorder %s439, %s453
      %p455 = scmp.eq.s32.totalorder %s38, 0
      %p456 = por %p454, %p455
      %s458 = sadd.s32 %s457, 1
      %p461 = scmp.eq.s32.totalorder %s32, 1
      %p462 = scmp.ne.s32.totalorder %s457, %s459
      %p463 = scmp.eq.s32.totalorder %s32, 0
      %p464 = por %p462, %p463
      %p465 = scmp.ne.s32.totalorder %s457, %s459
      %p466 = scmp.eq.s32.totalorder %s37, 1
      %p467 = por %p465, %p466
      %p468 = scmp.ne.s32.totalorder %s459, %s460
      %p469 = scmp.eq.s32.totalorder %s37, 0
      %p470 = por %p468, %p469
      %p471 = scmp.ne.s32.totalorder %s459, %s460
      %p472 = scmp.eq.s32.totalorder %s38, 1
      %p473 = por %p471, %p472
      %p475 = scmp.ne.s32.totalorder %s460, %s474
      %p476 = scmp.eq.s32.totalorder %s38, 0
      %p477 = por %p475, %p476
      %s479 = sadd.s32 %s478, 1
      %p482 = scmp.eq.s32.totalorder %s32, 1
      %p483 = scmp.ne.s32.totalorder %s478, %s480
      %p484 = scmp.eq.s32.totalorder %s32, 0
      %p485 = por %p483, %p484
      %p486 = scmp.ne.s32.totalorder %s478, %s480
      %p487 = scmp.eq.s32.totalorder %s37, 1
      %p488 = por %p486, %p487
      %p489 = scmp.ne.s32.totalorder %s480, %s481
      %p490 = scmp.eq.s32.totalorder %s37, 0
      %p491 = por %p489, %p490
      %p492 = scmp.ne.s32.totalorder %s480, %s481
      %p493 = scmp.eq.s32.totalorder %s38, 1
      %p494 = por %p492, %p493
      %p496 = scmp.ne.s32.totalorder %s481, %s495
      %p497 = scmp.eq.s32.totalorder %s38, 0
      %p498 = por %p496, %p497
      %s500 = sadd.s32 %s499, 1
      %p503 = scmp.eq.s32.totalorder %s32, 1
      %p504 = scmp.ne.s32.totalorder %s499, %s501
      %p505 = scmp.eq.s32.totalorder %s32, 0
      %p506 = por %p504, %p505
      %p507 = scmp.ne.s32.totalorder %s499, %s501
      %p508 = scmp.eq.s32.totalorder %s37, 1
      %p509 = por %p507, %p508
      %p510 = scmp.ne.s32.totalorder %s501, %s502
      %p511 = scmp.eq.s32.totalorder %s37, 0
      %p512 = por %p510, %p511
      %p513 = scmp.ne.s32.totalorder %s501, %s502
      %p514 = scmp.eq.s32.totalorder %s38, 1
      %p515 = por %p513, %p514
      %p517 = scmp.ne.s32.totalorder %s502, %s516
      %p518 = scmp.eq.s32.totalorder %s38, 0
      %p519 = por %p517, %p518
      %s521 = sadd.s32 %s520, 1
      %p524 = scmp.eq.s32.totalorder %s32, 1
      %p525 = scmp.ne.s32.totalorder %s520, %s522
      %p526 = scmp.eq.s32.totalorder %s32, 0
      %p527 = por %p525, %p526
      %p528 = scmp.ne.s32.totalorder %s520, %s522
      %p529 = scmp.eq.s32.totalorder %s37, 1
      %p530 = por %p528, %p529
      %p531 = scmp.ne.s32.totalorder %s522, %s523
      %p532 = scmp.eq.s32.totalorder %s37, 0
      %p533 = por %p531, %p532
      %p534 = scmp.ne.s32.totalorder %s522, %s523
      %p535 = scmp.eq.s32.totalorder %s38, 1
      %p536 = por %p534, %p535
      %p538 = scmp.ne.s32.totalorder %s523, %s537
      %p539 = scmp.eq.s32.totalorder %s38, 0
      %p540 = por %p538, %p539
      %p541 = scmp.le.s32.totalorder 1, %s32
      %p542 = scmp.lt.s32.totalorder %s32, 3
      %p543 = pnand %p541, %p542
      %p544 = pneg %p543
      // Predicated region
      $region9: #{tpu_custom_call.1} parent=5 // pred_check
        _
      $region10: #{tpu_custom_call.1} parent=5 // pred_check_branch
        %546 = sbr.rel (%p543) target = $region12
      $region11: #{tpu_custom_call.1} parent=5 // pred_region
        %s547 = ssub.s32 %s32, 1
        // Predicated region
        $region13: #{tpu_custom_call.1} parent=11 // pred_check
          %p548 = pneg %p53
        $region14: #{tpu_custom_call.1} parent=11 // pred_check_branch
          %550 = sbr.rel (%p548) target = $region16
        $region15: #{tpu_custom_call.1} parent=11 // pred_region
          %552 = vsyncadd [#allocation4], 0
          %s553 = sshll.u32 %s0, 4
          %s554 = int_to_ptr.hbm [resolvable:$true] %s553
          %s555 = sshll.u32 [#allocation3], 4
          %s556 = int_to_ptr.vmem [resolvable:$true] %s555
          %561 = dma.hbm_to_vmem [thread:$0]  %s554, 128, %s556, [#allocation4], 64, 64, 4
        $region16: #{tpu_custom_call.1} parent=11 // pred_fallthru
          _
        // Predicated region
        $region17: #{tpu_custom_call.1} parent=11 // pred_check
          %p562 = pneg %p386
        $region18: #{tpu_custom_call.1} parent=11 // pred_check_branch
          %564 = sbr.rel (%p562) target = $region20
        $region19: #{tpu_custom_call.1} parent=11 // pred_region
          %566 = vsyncadd [#allocation7], 0
          %s567 = sshll.u32 %s13, 4
          %s568 = int_to_ptr.hbm [resolvable:$true] %s567
          %s569 = sshll.u32 [#allocation8], 4
          %s570 = int_to_ptr.vmem [resolvable:$true] %s569
          %575 = dma.hbm_to_vmem [thread:$0]  %s568, 256, %s570, [#allocation7], 128, 128, 8
        $region20: #{tpu_custom_call.1} parent=11 // pred_fallthru
          _
        // Predicated region
        $region21: #{tpu_custom_call.1} parent=11 // pred_check
          %p576 = pneg %p407
        $region22: #{tpu_custom_call.1} parent=11 // pred_check_branch
          %578 = sbr.rel (%p576) target = $region24
        $region23: #{tpu_custom_call.1} parent=11 // pred_region
          %580 = vsyncadd [#allocation10], 0
          %s581 = sshll.u32 %s14, 4
          %s582 = int_to_ptr.hbm [resolvable:$true] %s581
          %s583 = sshll.u32 [#allocation9], 4
          %s584 = int_to_ptr.vmem [resolvable:$true] %s583
          %589 = dma.hbm_to_vmem [thread:$0]  %s582, 256, %s584, [#allocation10], 128, 128, 8
        $region24: #{tpu_custom_call.1} parent=11 // pred_fallthru
          _
        // Predicated region
        $region25: #{tpu_custom_call.1} parent=11 // pred_check
          %p590 = pneg %p428
        $region26: #{tpu_custom_call.1} parent=11 // pred_check_branch
          %592 = sbr.rel (%p590) target = $region28
        $region27: #{tpu_custom_call.1} parent=11 // pred_region
          _
        $region28: #{tpu_custom_call.1} parent=11 // pred_fallthru
          _
        // Predicated region
        $region29: #{tpu_custom_call.1} parent=11 // pred_check
          %p593 = pneg %p449
        $region30: #{tpu_custom_call.1} parent=11 // pred_check_branch
          %595 = sbr.rel (%p593) target = $region32
        $region31: #{tpu_custom_call.1} parent=11 // pred_region
          _
        $region32: #{tpu_custom_call.1} parent=11 // pred_fallthru
          _
        // Predicated region
        $region33: #{tpu_custom_call.1} parent=11 // pred_check
          %p596 = pneg %p470
        $region34: #{tpu_custom_call.1} parent=11 // pred_check_branch
          %598 = sbr.rel (%p596) target = $region36
        $region35: #{tpu_custom_call.1} parent=11 // pred_region
          _
        $region36: #{tpu_custom_call.1} parent=11 // pred_fallthru
          _
        // Predicated region
        $region37: #{tpu_custom_call.1} parent=11 // pred_check
          %p599 = pneg %p491
        $region38: #{tpu_custom_call.1} parent=11 // pred_check_branch
          %601 = sbr.rel (%p599) target = $region40
        $region39: #{tpu_custom_call.1} parent=11 // pred_region
          _
        $region40: #{tpu_custom_call.1} parent=11 // pred_fallthru
          _
        // Predicated region
        $region41: #{tpu_custom_call.1} parent=11 // pred_check
          %p602 = pneg %p512
        $region42: #{tpu_custom_call.1} parent=11 // pred_check_branch
          %604 = sbr.rel (%p602) target = $region44
        $region43: #{tpu_custom_call.1} parent=11 // pred_region
          %606 = vsyncadd [#allocation10], 0
          %s607 = sshll.u32 %s19, 4
          %s608 = int_to_ptr.hbm [resolvable:$true] %s607
          %s609 = sshll.u32 [#allocation11], 4
          %s610 = int_to_ptr.vmem [resolvable:$true] %s609
          %615 = dma.hbm_to_vmem [thread:$0]  %s608, 256, %s610, [#allocation10], 64, 64, 4
        $region44: #{tpu_custom_call.1} parent=11 // pred_fallthru
          _
      $region12: #{tpu_custom_call.1} parent=5 // pred_fallthru
        _
      %p616 = scmp.lt.s32.totalorder %s32, 2
      // Predicated region
      $region45: #{tpu_custom_call.1} parent=5 // pred_check
        %p617 = pneg %p616
      $region46: #{tpu_custom_call.1} parent=5 // pred_check_branch
        %619 = sbr.rel (%p617) target = $region48
      $region47: #{tpu_custom_call.1} parent=5 // pred_region
        // Predicated region
        $region49: #{tpu_custom_call.1} parent=47 // pred_check
          %p620 = pneg %p73
        $region50: #{tpu_custom_call.1} parent=47 // pred_check_branch
          %622 = sbr.rel (%p620) target = $region52
        $region51: #{tpu_custom_call.1} parent=47 // pred_region
          %p623 = scmp.lt.s32.totalorder %s32, 1
          %s624 = scalar_select %p623, %s32, 1
          %s625 = scalar_lea.vmem %s1, %s624
        $region52: #{tpu_custom_call.1} parent=47 // pred_fallthru
          _
        // Predicated region
        $region53: #{tpu_custom_call.1} parent=47 // pred_check
          %p626 = pneg %p99
        $region54: #{tpu_custom_call.1} parent=47 // pred_check_branch
          %628 = sbr.rel (%p626) target = $region56
        $region55: #{tpu_custom_call.1} parent=47 // pred_region
          %p629 = scmp.lt.s32.totalorder %s32, 1
          %s630 = scalar_select %p629, %s32, 1
          %s631 = smul.addr %s630, 4
          %s632 = smul.addr %s631, 4
          %s633 = scalar_lea.vmem %s2, %s632
        $region56: #{tpu_custom_call.1} parent=47 // pred_fallthru
          _
        // Predicated region
        $region57: #{tpu_custom_call.1} parent=47 // pred_check
          %p634 = pneg %p125
        $region58: #{tpu_custom_call.1} parent=47 // pred_check_branch
          %636 = sbr.rel (%p634) target = $region60
        $region59: #{tpu_custom_call.1} parent=47 // pred_region
          %p637 = scmp.lt.s32.totalorder %s32, 1
          %s638 = scalar_select %p637, %s32, 1
          %s639 = scalar_lea.vmem %s3, %s638
        $region60: #{tpu_custom_call.1} parent=47 // pred_fallthru
          _
        // Predicated region
        $region61: #{tpu_custom_call.1} parent=47 // pred_check
          %p640 = pneg %p151
        $region62: #{tpu_custom_call.1} parent=47 // pred_check_branch
          %642 = sbr.rel (%p640) target = $region64
        $region63: #{tpu_custom_call.1} parent=47 // pred_region
          %p643 = scmp.lt.s32.totalorder %s32, 1
          %s644 = scalar_select %p643, %s32, 1
          %s645 = smul.addr %s644, 4
          %s646 = smul.addr %s645, 4
          %s647 = scalar_lea.vmem %s4, %s646
        $region64: #{tpu_custom_call.1} parent=47 // pred_fallthru
          _
        // Predicated region
        $region65: #{tpu_custom_call.1} parent=47 // pred_check
          %p648 = pneg %p177
        $region66: #{tpu_custom_call.1} parent=47 // pred_check_branch
          %650 = sbr.rel (%p648) target = $region68
        $region67: #{tpu_custom_call.1} parent=47 // pred_region
          %p651 = scmp.lt.s32.totalorder %s32, 1
          %s652 = scalar_select %p651, %s32, 1
          %s653 = scalar_lea.vmem %s5, %s652
        $region68: #{tpu_custom_call.1} parent=47 // pred_fallthru
          _
        // Predicated region
        $region69: #{tpu_custom_call.1} parent=47 // pred_check
          %p654 = pneg %p203
        $region70: #{tpu_custom_call.1} parent=47 // pred_check_branch
          %656 = sbr.rel (%p654) target = $region72
        $region71: #{tpu_custom_call.1} parent=47 // pred_region
          %p657 = scmp.lt.s32.totalorder %s32, 1
          %s658 = scalar_select %p657, %s32, 1
          %s659 = smul.addr %s658, 4
          %s660 = smul.addr %s659, 4
          %s661 = scalar_lea.vmem %s6, %s660
        $region72: #{tpu_custom_call.1} parent=47 // pred_fallthru
          _
        // Predicated region
        $region73: #{tpu_custom_call.1} parent=47 // pred_check
          %p662 = pneg %p229
        $region74: #{tpu_custom_call.1} parent=47 // pred_check_branch
          %664 = sbr.rel (%p662) target = $region76
        $region75: #{tpu_custom_call.1} parent=47 // pred_region
          %p665 = scmp.lt.s32.totalorder %s32, 1
          %s666 = scalar_select %p665, %s32, 1
          %s667 = scalar_lea.vmem %s7, %s666
        $region76: #{tpu_custom_call.1} parent=47 // pred_fallthru
          _
        // Predicated region
        $region77: #{tpu_custom_call.1} parent=47 // pred_check
          %p668 = pneg %p255
        $region78: #{tpu_custom_call.1} parent=47 // pred_check_branch
          %670 = sbr.rel (%p668) target = $region80
        $region79: #{tpu_custom_call.1} parent=47 // pred_region
          %p671 = scmp.lt.s32.totalorder %s32, 1
          %s672 = scalar_select %p671, %s32, 1
          %s673 = smul.addr %s672, 4
          %s674 = smul.addr %s673, 4
          %s675 = scalar_lea.vmem %s8, %s674
        $region80: #{tpu_custom_call.1} parent=47 // pred_fallthru
          _
        // Predicated region
        $region81: #{tpu_custom_call.1} parent=47 // pred_check
          %p676 = pneg %p281
        $region82: #{tpu_custom_call.1} parent=47 // pred_check_branch
          %678 = sbr.rel (%p676) target = $region84
        $region83: #{tpu_custom_call.1} parent=47 // pred_region
          %p679 = scmp.lt.s32.totalorder %s32, 1
          %s680 = scalar_select %p679, %s32, 1
          %s681 = scalar_lea.vmem %s9, %s680
        $region84: #{tpu_custom_call.1} parent=47 // pred_fallthru
          _
        // Predicated region
        $region85: #{tpu_custom_call.1} parent=47 // pred_check
          %p682 = pneg %p307
        $region86: #{tpu_custom_call.1} parent=47 // pred_check_branch
          %684 = sbr.rel (%p682) target = $region88
        $region87: #{tpu_custom_call.1} parent=47 // pred_region
          %p685 = scmp.lt.s32.totalorder %s32, 1
          %s686 = scalar_select %p685, %s32, 1
          %s687 = smul.addr %s686, 4
          %s688 = smul.addr %s687, 4
          %s689 = scalar_lea.vmem %s10, %s688
        $region88: #{tpu_custom_call.1} parent=47 // pred_fallthru
          _
        // Predicated region
        $region89: #{tpu_custom_call.1} parent=47 // pred_check
          %p690 = pneg %p333
        $region90: #{tpu_custom_call.1} parent=47 // pred_check_branch
          %692 = sbr.rel (%p690) target = $region92
        $region91: #{tpu_custom_call.1} parent=47 // pred_region
          %s693 = sand.u32 %s32, 1
          %s694 = scalar_lea.sflag [#allocation7], %s693
          %s695 = sand.u32 %s323, 1
          %s696 = smul.addr %s695, 16
          %s697 = scalar_lea.vmem [#allocation6], %s696
          %699 = vsyncadd %s694, 0
          %s700 = smul.addr %s32, 4
          %s701 = smul.addr %s700, 4
          %s702 = scalar_lea.hbm %s11, %s701
          %s703 = sshll.u32 %s702, 4
          %s704 = int_to_ptr.hbm [resolvable:$true] %s703
          %s705 = sshll.u32 %s697, 4
          %s706 = int_to_ptr.vmem [resolvable:$true] %s705
          %711 = dma.hbm_to_vmem [thread:$0]  %s704, 256, %s706, %s694, 64, 64, 4
        $region92: #{tpu_custom_call.1} parent=47 // pred_fallthru
          _
        // Predicated region
        $region93: #{tpu_custom_call.1} parent=47 // pred_check
          %p712 = pneg %p359
        $region94: #{tpu_custom_call.1} parent=47 // pred_check_branch
          %714 = sbr.rel (%p712) target = $region96
        $region95: #{tpu_custom_call.1} parent=47 // pred_region
          %p715 = scmp.lt.s32.totalorder %s32, 1
          %s716 = scalar_select %p715, %s32, 1
          %s717 = smul.addr %s716, 8
          %s718 = smul.addr %s717, 4
          %s719 = scalar_lea.vmem %s12, %s718
        $region96: #{tpu_custom_call.1} parent=47 // pred_fallthru
          _
      $region48: #{tpu_custom_call.1} parent=5 // pred_fallthru
        _
      %p720 = scmp.le.s32.totalorder 1, %s32
      %p721 = scmp.lt.s32.totalorder %s32, 3
      %p722 = pnand %p720, %p721
      %p723 = pneg %p722
      // Predicated region
      $region97: #{tpu_custom_call.1} parent=5 // pred_check
        _
      $region98: #{tpu_custom_call.1} parent=5 // pred_check_branch
        %725 = sbr.rel (%p722) target = $region100
      $region99: #{tpu_custom_call.1} parent=5 // pred_region
        %s726 = ssub.s32 %s32, 1
        // Predicated region
        $region101: #{tpu_custom_call.1} parent=99 // pred_check
          %p727 = pneg %p53
        $region102: #{tpu_custom_call.1} parent=99 // pred_check_branch
          %729 = sbr.rel (%p727) target = $region104
        $region103: #{tpu_custom_call.1} parent=99 // pred_region
          %731 = dma.done [#allocation4], 128
        $region104: #{tpu_custom_call.1} parent=99 // pred_fallthru
          _
        %s732 = sand.u32 %s37, 1
        %s733 = scalar_lea.sflag [#allocation7], %s732
        %s734 = sand.u32 %s326, 1
        %s735 = smul.addr %s734, 16
        %s736 = scalar_lea.vmem [#allocation6], %s735
        // Predicated region
        $region105: #{tpu_custom_call.1} parent=99 // pred_check
          %p737 = pneg %p339
        $region106: #{tpu_custom_call.1} parent=99 // pred_check_branch
          %739 = sbr.rel (%p737) target = $region108
        $region107: #{tpu_custom_call.1} parent=99 // pred_region
          %741 = dma.done %s733, 256
        $region108: #{tpu_custom_call.1} parent=99 // pred_fallthru
          _
        // Predicated region
        $region109: #{tpu_custom_call.1} parent=99 // pred_check
          %p742 = pneg %p386
        $region110: #{tpu_custom_call.1} parent=99 // pred_check_branch
          %744 = sbr.rel (%p742) target = $region112
        $region111: #{tpu_custom_call.1} parent=99 // pred_region
          %746 = dma.done [#allocation7], 256
        $region112: #{tpu_custom_call.1} parent=99 // pred_fallthru
          _
        // Predicated region
        $region113: #{tpu_custom_call.1} parent=99 // pred_check
          %p747 = pneg %p407
        $region114: #{tpu_custom_call.1} parent=99 // pred_check_branch
          %749 = sbr.rel (%p747) target = $region116
        $region115: #{tpu_custom_call.1} parent=99 // pred_region
          %751 = dma.done [#allocation10], 256
        $region116: #{tpu_custom_call.1} parent=99 // pred_fallthru
          _
        // Predicated region
        $region117: #{tpu_custom_call.1} parent=99 // pred_check
          %p752 = pneg %p512
        $region118: #{tpu_custom_call.1} parent=99 // pred_check_branch
          %754 = sbr.rel (%p752) target = $region120
        $region119: #{tpu_custom_call.1} parent=99 // pred_region
          %756 = dma.done [#allocation10], 256
        $region120: #{tpu_custom_call.1} parent=99 // pred_fallthru
          _
        %p757 = pneg %p53
        %p758 = pneg %p50
        %p759 = scmp.lt.s32.totalorder %s37, 1
        %s760 = scalar_select %p759, %s37, 1
        %s761 = scalar_lea.vmem %s1, %s760
        %p762 = pneg %p79
        %p763 = pneg %p76
        %p764 = scmp.lt.s32.totalorder %s37, 1
        %s765 = scalar_select %p764, %s37, 1
        %s766 = smul.addr %s765, 4
        %s767 = smul.addr %s766, 4
        %s768 = scalar_lea.vmem %s2, %s767
        %p769 = pneg %p105
        %p770 = pneg %p102
        %p771 = scmp.lt.s32.totalorder %s37, 1
        %s772 = scalar_select %p771, %s37, 1
        %s773 = scalar_lea.vmem %s3, %s772
        %p774 = pneg %p131
        %p775 = pneg %p128
        %p776 = scmp.lt.s32.totalorder %s37, 1
        %s777 = scalar_select %p776, %s37, 1
        %s778 = smul.addr %s777, 4
        %s779 = smul.addr %s778, 4
        %s780 = scalar_lea.vmem %s4, %s779
        %p781 = pneg %p157
        %p782 = pneg %p154
        %p783 = scmp.lt.s32.totalorder %s37, 1
        %s784 = scalar_select %p783, %s37, 1
        %s785 = scalar_lea.vmem %s5, %s784
        %p786 = pneg %p183
        %p787 = pneg %p180
        %p788 = scmp.lt.s32.totalorder %s37, 1
        %s789 = scalar_select %p788, %s37, 1
        %s790 = smul.addr %s789, 4
        %s791 = smul.addr %s790, 4
        %s792 = scalar_lea.vmem %s6, %s791
        %p793 = pneg %p209
        %p794 = pneg %p206
        %p795 = scmp.lt.s32.totalorder %s37, 1
        %s796 = scalar_select %p795, %s37, 1
        %s797 = scalar_lea.vmem %s7, %s796
        %p798 = pneg %p235
        %p799 = pneg %p232
        %p800 = scmp.lt.s32.totalorder %s37, 1
        %s801 = scalar_select %p800, %s37, 1
        %s802 = smul.addr %s801, 4
        %s803 = smul.addr %s802, 4
        %s804 = scalar_lea.vmem %s8, %s803
        %p805 = pneg %p261
        %p806 = pneg %p258
        %p807 = scmp.lt.s32.totalorder %s37, 1
        %s808 = scalar_select %p807, %s37, 1
        %s809 = scalar_lea.vmem %s9, %s808
        %p810 = pneg %p287
        %p811 = pneg %p284
        %p812 = scmp.lt.s32.totalorder %s37, 1
        %s813 = scalar_select %p812, %s37, 1
        %s814 = smul.addr %s813, 4
        %s815 = smul.addr %s814, 4
        %s816 = scalar_lea.vmem %s10, %s815
        %p817 = pneg %p313
        %p818 = pneg %p310
        %s819 = sand.u32 %s37, 1
        %s820 = scalar_lea.sflag [#allocation7], %s819
        %s821 = sand.u32 %s326, 1
        %s822 = smul.addr %s821, 16
        %s823 = scalar_lea.vmem [#allocation6], %s822
        %p824 = pneg %p339
        %p825 = pneg %p336
        %p826 = scmp.lt.s32.totalorder %s37, 1
        %s827 = scalar_select %p826, %s37, 1
        %s828 = smul.addr %s827, 8
        %s829 = smul.addr %s828, 4
        %s830 = scalar_lea.vmem %s12, %s829
        %p831 = pneg %p365
        %p832 = pneg %p362
        %p833 = pneg %p386
        %p834 = pneg %p383
        %p835 = pneg %p407
        %p836 = pneg %p404
        %p837 = pneg %p428
        %p838 = pneg %p425
        %p839 = pneg %p449
        %p840 = pneg %p446
        %p841 = pneg %p470
        %p842 = pneg %p467
        %p843 = pneg %p491
        %p844 = pneg %p488
        %p845 = pneg %p512
        %p846 = pneg %p509
        %p847 = pneg %p533
        %p848 = pneg %p530
        %p849 = scmp.lt.s32.totalorder %s37, 1
        %s850 = scalar_select %p849, %s37, 1
        %s851 = scalar_lea.vmem %s1, %s850
        %p852 = scmp.lt.s32.totalorder %s37, 1
        %s853 = scalar_select %p852, %s37, 1
        %s854 = smul.addr %s853, 4
        %s855 = smul.addr %s854, 4
        %s856 = scalar_lea.vmem %s2, %s855
        %p857 = scmp.lt.s32.totalorder %s37, 1
        %s858 = scalar_select %p857, %s37, 1
        %s859 = scalar_lea.vmem %s3, %s858
        %p860 = scmp.lt.s32.totalorder %s37, 1
        %s861 = scalar_select %p860, %s37, 1
        %s862 = smul.addr %s861, 4
        %s863 = smul.addr %s862, 4
        %s864 = scalar_lea.vmem %s4, %s863
        %p865 = scmp.lt.s32.totalorder %s37, 1
        %s866 = scalar_select %p865, %s37, 1
        %s867 = scalar_lea.vmem %s5, %s866
        %p868 = scmp.lt.s32.totalorder %s37, 1
        %s869 = scalar_select %p868, %s37, 1
        %s870 = smul.addr %s869, 4
        %s871 = smul.addr %s870, 4
        %s872 = scalar_lea.vmem %s6, %s871
        %p873 = scmp.lt.s32.totalorder %s37, 1
        %s874 = scalar_select %p873, %s37, 1
        %s875 = scalar_lea.vmem %s7, %s874
        %p876 = scmp.lt.s32.totalorder %s37, 1
        %s877 = scalar_select %p876, %s37, 1
        %s878 = smul.addr %s877, 4
        %s879 = smul.addr %s878, 4
        %s880 = scalar_lea.vmem %s8, %s879
        %p881 = scmp.lt.s32.totalorder %s37, 1
        %s882 = scalar_select %p881, %s37, 1
        %s883 = scalar_lea.vmem %s9, %s882
        %p884 = scmp.lt.s32.totalorder %s37, 1
        %s885 = scalar_select %p884, %s37, 1
        %s886 = smul.addr %s885, 4
        %s887 = smul.addr %s886, 4
        %s888 = scalar_lea.vmem %s10, %s887
        %p889 = scmp.lt.s32.totalorder %s37, 1
        %s890 = scalar_select %p889, %s37, 1
        %s891 = smul.addr %s890, 8
        %s892 = smul.addr %s891, 4
        %s893 = scalar_lea.vmem %s12, %s892
        %p895 = scmp.eq.s32.totalorder %s37, 0
        // Predicated region
        $region121: #{tpu_custom_call.1} parent=99 // pred_check
          %p896 = pneg %p895
        $region122: #{tpu_custom_call.1} parent=99 // pred_check_branch
          %898 = sbr.rel (%p896) target = $region124
        $region123: #{tpu_custom_call.1} parent=99 // pred_region
          %v899 = vld [vmem:[#allocation3] sm:$0xf]
          %v900 = vld [vmem:[#allocation3 + $0x4] sm:$0xf]
          %v901 = vunpack.c.l.bf16 %v899
          %v902 = vunpack.c.l.bf16 %v900
          %vm903 = vcmask 261120
          %904 = vst.msk [vmem:[#allocation2] sm:$0xff] %vm903, %v901
          %905 = vst.msk [vmem:[#allocation2 + $0x8] sm:$0xff] %vm903, %v902
        $region124: #{tpu_custom_call.1} parent=99 // pred_fallthru
          _
        %v906 = vld [vmem:[#allocation2] sm:$0xff]
        %v907 = vld [vmem:[#allocation2 + $0x8] sm:$0xff]
        %v908 = vld [vmem:[%s851] sm:$0x1]
        %v909 = vunpack.c.l.bf16 %v908
        %v910 = vmul.f32 %v906, %v906
        %v911 = vmul.f32 %v907, %v907
        %vm912 = vcmask 261120
        %v913 = vsel %vm912, %v910, 0.0
        %914 = vadd.xlane.f32.xlu0 %v913
        %v915 = vpop.xlane.xlu0 %914
        %v916 = vsel %vm912, %v911, 0.0
        %917 = vadd.xlane.f32.xlu0 %v916
        %v918 = vpop.xlane.xlu0 %917
        %v919 = vrcp.pop 32.0
        %v920 = vmul.f32 32.0, %v919
        %v921 = vsub.f32 1.0, %v920
        %v922 = vmul.f32 %v919, %v921
        %v923 = vadd.f32 %v919, %v922
        %vm924 = vweird.f32 %v919
        %v925 = vsel %vm924, %v919, %v923
        %v926 = vmul.f32 %v915, %v925
        %v927 = vmul.f32 %v918, %v925
        %v928 = vadd.f32 %v926, 1e-06
        %v929 = vadd.f32 %v927, 1e-06
        %v930 = vrsqrt.pop %v928
        %v931 = vmul.f32 %v930, %v928
        %v932 = vmul.f32 %v931, %v930
        %v933 = vmul.f32 0.5, %v932
        %v934 = vsub.f32 1.5, %v933
        %v935 = vmul.f32 %v930, %v934
        %vm936 = vweird.f32 %v928
        %vm937 = vweird.f32 %v930
        %vm938 = vmor %vm936, %vm937
        %v939 = vsel %vm938, %v930, %v935
        %v940 = vrsqrt.pop %v929
        %v941 = vmul.f32 %v940, %v929
        %v942 = vmul.f32 %v941, %v940
        %v943 = vmul.f32 0.5, %v942
        %v944 = vsub.f32 1.5, %v943
        %v945 = vmul.f32 %v940, %v944
        %vm946 = vweird.f32 %v929
        %vm947 = vweird.f32 %v940
        %vm948 = vmor %vm946, %vm947
        %v949 = vsel %vm948, %v940, %v945
        %v950 = vmul.f32 %v906, %v939
        %v951 = vmul.f32 %v907, %v949
        %v952 = vperm.slane %v909, 0
        %v953 = vmul.f32 %v950, %v952
        %v954 = vmul.f32 %v951, %v952
        %v955 = vpack.c.bf16 %v954, %v953
        %v956 = vld [vmem:[%s856] sm:$0xf]
        %v957 = vld [vmem:[%s856 + $0x4] sm:$0xf]
        %v958 = vld [vmem:[%s856 + $0x8] sm:$0xf]
        %v959 = vld [vmem:[%s856 + $0xc] sm:$0xf]
        %v960 = vld [vmem:[%s859] sm:$0x1]
        %v961 = vunpack.c.l.bf16 %v960
        %v962 = vperm.slane %v961, 0
        %v967 = vunpack.c.l.b16 %v956
        %v968 = vunpack.c.l.b16 %v957
        %v969 = vunpack.c.l.b16 %v958
        %v970 = vunpack.c.l.b16 %v959
        %v971 = vpack.c.b16 %v968, %v967
        %v972 = vpack.c.b16 %v970, %v969
        %v976 = vsel %vm912, %v955, 0
        %978 = vmatpush.bf16.msra.mxu0 0
        %979 = vmatpush.bf16.msra.mxu0 0
        %980 = vmatpush.bf16.msra.mxu0 0
        %981 = vmatpush.bf16.msra.mxu0 0
        %982 = vmatpush.bf16.msra.mxu0 0
        %983 = vmatpush.bf16.msra.mxu0 0
        %984 = vmatpush.bf16.msra.mxu0 %v972
        %985 = vmatpush.bf16.msra.mxu0 %v971
        %986 = vmatmul.bf16.gmra.mxu0 %v976
        %v987 = vpop.f32.mrf.mxu0
        %v988 = vadd.f32 %v962, %v987
        %v989 = vpop.f32.mrf.mxu0
        %v990 = vadd.f32 %v962, %v989
        %991 = vdwg.mxu0
        %v992 = vld [vmem:[%s864] sm:$0xf]
        %v993 = vld [vmem:[%s864 + $0x4] sm:$0xf]
        %v994 = vld [vmem:[%s864 + $0x8] sm:$0xf]
        %v995 = vld [vmem:[%s864 + $0xc] sm:$0xf]
        %v996 = vld [vmem:[%s867] sm:$0x1]
        %v997 = vunpack.c.l.bf16 %v996
        %v998 = vperm.slane %v997, 0
        %v1003 = vunpack.c.l.b16 %v992
        %v1004 = vunpack.c.l.b16 %v993
        %v1005 = vunpack.c.l.b16 %v994
        %v1006 = vunpack.c.l.b16 %v995
        %v1007 = vpack.c.b16 %v1004, %v1003
        %v1008 = vpack.c.b16 %v1006, %v1005
        %1011 = vmatpush.bf16.msra.mxu0 0
        %1012 = vmatpush.bf16.msra.mxu0 0
        %1013 = vmatpush.bf16.msra.mxu0 0
        %1014 = vmatpush.bf16.msra.mxu0 0
        %1015 = vmatpush.bf16.msra.mxu0 0
        %1016 = vmatpush.bf16.msra.mxu0 0
        %1017 = vmatpush.bf16.msra.mxu0 %v1008
        %1018 = vmatpush.bf16.msra.mxu0 %v1007
        %1019 = vmatmul.bf16.gmra.mxu0 %v976
        %v1020 = vpop.f32.mrf.mxu0
        %v1021 = vadd.f32 %v998, %v1020
        %v1022 = vpop.f32.mrf.mxu0
        %v1023 = vadd.f32 %v998, %v1022
        %1024 = vdwg.mxu0
        %v1025 = vld [vmem:[%s872] sm:$0xf]
        %v1026 = vld [vmem:[%s872 + $0x4] sm:$0xf]
        %v1027 = vld [vmem:[%s872 + $0x8] sm:$0xf]
        %v1028 = vld [vmem:[%s872 + $0xc] sm:$0xf]
        %v1029 = vld [vmem:[%s875] sm:$0x1]
        %v1030 = vunpack.c.l.bf16 %v1029
        %v1031 = vperm.slane %v1030, 0
        %v1036 = vunpack.c.l.b16 %v1025
        %v1037 = vunpack.c.l.b16 %v1026
        %v1038 = vunpack.c.l.b16 %v1027
        %v1039 = vunpack.c.l.b16 %v1028
        %v1040 = vpack.c.b16 %v1037, %v1036
        %v1041 = vpack.c.b16 %v1039, %v1038
        %1044 = vmatpush.bf16.msra.mxu0 0
        %1045 = vmatpush.bf16.msra.mxu0 0
        %1046 = vmatpush.bf16.msra.mxu0 0
        %1047 = vmatpush.bf16.msra.mxu0 0
        %1048 = vmatpush.bf16.msra.mxu0 0
        %1049 = vmatpush.bf16.msra.mxu0 0
        %1050 = vmatpush.bf16.msra.mxu0 %v1041
        %1051 = vmatpush.bf16.msra.mxu0 %v1040
        %1052 = vmatmul.bf16.gmra.mxu0 %v976
        %v1053 = vpop.f32.mrf.mxu0
        %v1054 = vadd.f32 %v1031, %v1053
        %v1055 = vpop.f32.mrf.mxu0
        %v1056 = vadd.f32 %v1031, %v1055
        %1057 = vdwg.mxu0
        %v1058 = vld [vmem:[#allocation8] sm:$0xff]
        %v1059 = vld [vmem:[#allocation8 + $0x8] sm:$0xff]
        %v1060 = vld [vmem:[#allocation9] sm:$0xff]
        %v1061 = vld [vmem:[#allocation9 + $0x8] sm:$0xff]
        %v1062 = vld [vmem:[%s15] sm:$0xf]
        %v1063 = vld [vmem:[%s15 + $0x4] sm:$0xf]
        %v1064 = vld [vmem:[%s15 + $0x8] sm:$0xf]
        %v1065 = vld [vmem:[%s15 + $0xc] sm:$0xf]
        %v1066 = vpack.c.bf16 %v990, %v988
        %v1071 = vunpack.c.l.b16 %v1062
        %v1072 = vunpack.c.l.b16 %v1063
        %v1073 = vunpack.c.l.b16 %v1064
        %v1074 = vunpack.c.l.b16 %v1065
        %v1075 = vpack.c.b16 %v1072, %v1071
        %v1076 = vpack.c.b16 %v1074, %v1073
        %v1080 = vsel %vm912, %v1066, 0
        %1082 = vmatpush.bf16.msra.mxu0 0
        %1083 = vmatpush.bf16.msra.mxu0 0
        %1084 = vmatpush.bf16.msra.mxu0 0
        %1085 = vmatpush.bf16.msra.mxu0 0
        %1086 = vmatpush.bf16.msra.mxu0 0
        %1087 = vmatpush.bf16.msra.mxu0 0
        %1088 = vmatpush.bf16.msra.mxu0 %v1076
        %1089 = vmatpush.bf16.msra.mxu0 %v1075
        %1090 = vmatmul.bf16.gmra.mxu0 %v1080
        %v1091 = vpop.f32.mrf.mxu0
        %v1092 = vadd.f32 0.0, %v1091
        %v1093 = vpop.f32.mrf.mxu0
        %v1094 = vadd.f32 0.0, %v1093
        %1095 = vdwg.mxu0
        %v1096 = vpack.c.bf16 %v1023, %v1021
        %v1098 = vsel %vm912, %v1096, 0
        %1100 = vmatpush.bf16.msra.mxu0 0
        %1101 = vmatpush.bf16.msra.mxu0 0
        %1102 = vmatpush.bf16.msra.mxu0 0
        %1103 = vmatpush.bf16.msra.mxu0 0
        %1104 = vmatpush.bf16.msra.mxu0 0
        %1105 = vmatpush.bf16.msra.mxu0 0
        %1106 = vmatpush.bf16.msra.mxu0 %v1076
        %1107 = vmatpush.bf16.msra.mxu0 %v1075
        %1108 = vmatmul.bf16.gmra.mxu0 %v1098
        %v1109 = vpop.f32.mrf.mxu0
        %v1110 = vadd.f32 0.0, %v1109
        %v1111 = vpop.f32.mrf.mxu0
        %v1112 = vadd.f32 0.0, %v1111
        %1113 = vdwg.mxu0
        %v1114 = vmul.f32 %v988, %v1058
        %v1115 = vmul.f32 %v990, %v1059
        %v1116 = vmul.f32 %v1092, %v1060
        %v1117 = vmul.f32 %v1094, %v1061
        %v1118 = vadd.f32 %v1114, %v1116
        %v1119 = vadd.f32 %v1115, %v1117
        %v1120 = vmul.f32 %v1021, %v1058
        %v1121 = vmul.f32 %v1023, %v1059
        %v1122 = vmul.f32 %v1110, %v1060
        %v1123 = vmul.f32 %v1112, %v1061
        %v1124 = vadd.f32 %v1120, %v1122
        %v1125 = vadd.f32 %v1121, %v1123
        %v1126 = vld [vmem:[%s16] sm:$0x1]
        %v1128 = vperm.slane %v1126, 0
        %v1130 = vmul.f32 %v1118, %v1128
        %v1131 = vmul.f32 %v1119, %v1128
        %s1132 = scalar_lea.vmem %s16, 1
        %v1133 = vld [vmem:[%s1132] sm:$0x1]
        %v1135 = vperm.slane %v1133, 0
        %v1137 = vmul.f32 %v1118, %v1135
        %v1138 = vmul.f32 %v1119, %v1135
        %s1139 = scalar_lea.vmem %s16, 2
        %v1140 = vld [vmem:[%s1139] sm:$0x1]
        %v1142 = vperm.slane %v1140, 0
        %v1144 = vmul.f32 %v1118, %v1142
        %v1145 = vmul.f32 %v1119, %v1142
        %s1146 = scalar_lea.vmem %s16, 3
        %v1147 = vld [vmem:[%s1146] sm:$0x1]
        %v1149 = vperm.slane %v1147, 0
        %v1151 = vmul.f32 %v1118, %v1149
        %v1152 = vmul.f32 %v1119, %v1149
        %v1153 = vpack.c.bf16 %v1131, %v1130
        %v1154 = vpack.c.bf16 %v1138, %v1137
        %v1155 = vpack.c.bf16 %v1145, %v1144
        %v1156 = vpack.c.bf16 %v1152, %v1151
        %v1157 = vpack.c.bf16 %v1125, %v1124
        %v1158 = vpack.c.bf16 %v1056, %v1054
        %v1160 = vsel %vm912, %v1153, 0
        %v1163 = vsel %vm912, %v1154, 0
        %v1166 = vsel %vm912, %v1155, 0
        %v1169 = vsel %vm912, %v1156, 0
        %v1172 = vsel %vm912, %v1157, 0
        %1174 = vmatpush.bf16.xpose.msra.mxu0 0
        %1175 = vmatpush.bf16.xpose.msra.mxu0 0
        %1176 = vmatpush.bf16.xpose.msra.mxu0 0
        %1177 = vmatpush.bf16.xpose.msra.mxu0 0
        %1178 = vmatpush.bf16.xpose.msra.mxu0 0
        %1179 = vmatpush.bf16.xpose.msra.mxu0 0
        %1180 = vmatpush.bf16.xpose.msra.mxu0 0
        %1181 = vmatpush.bf16.xpose.msra.mxu0 %v1172
        %1182 = vmatmul.bf16.gmra.mxu0 %v1160
        %v1183 = vpop.f32.mrf.mxu0
        %v1184 = vadd.f32 0.0, %v1183
        %v1185 = vpop.f32.mrf.mxu0
        %v1186 = vadd.f32 0.0, %v1185
        %1187 = vmatmul.bf16.gmra.mxu0 %v1163
        %v1188 = vpop.f32.mrf.mxu0
        %v1189 = vadd.f32 0.0, %v1188
        %v1190 = vpop.f32.mrf.mxu0
        %v1191 = vadd.f32 0.0, %v1190
        %1192 = vmatmul.bf16.gmra.mxu0 %v1166
        %v1193 = vpop.f32.mrf.mxu0
        %v1194 = vadd.f32 0.0, %v1193
        %v1195 = vpop.f32.mrf.mxu0
        %v1196 = vadd.f32 0.0, %v1195
        %1197 = vmatmul.bf16.gmra.mxu0 %v1169
        %v1198 = vpop.f32.mrf.mxu0
        %v1199 = vadd.f32 0.0, %v1198
        %v1200 = vpop.f32.mrf.mxu0
        %v1201 = vadd.f32 0.0, %v1200
        %1202 = vdwg.mxu0
        %v1203 = vmul.f32 %v1184, 0.35355338
        %v1204 = vmul.f32 %v1186, 0.35355338
        %v1205 = vmul.f32 %v1189, 0.35355338
        %v1206 = vmul.f32 %v1191, 0.35355338
        %v1207 = vmul.f32 %v1194, 0.35355338
        %v1208 = vmul.f32 %v1196, 0.35355338
        %v1209 = vmul.f32 %v1199, 0.35355338
        %v1210 = vmul.f32 %v1201, 0.35355338
        %v1211 = vld [vmem:[%s17] sm:$0xff]
        %v1212 = vld [vmem:[%s17 + $0x8] sm:$0xff]
        %v1213 = vld [vmem:[%s17 + $0x10] sm:$0xff]
        %v1214 = vld [vmem:[%s17 + $0x18] sm:$0xff]
        %v1215 = vld [vmem:[%s17 + $0x20] sm:$0xff]
        %v1216 = vld [vmem:[%s17 + $0x28] sm:$0xff]
        %v1217 = vld [vmem:[%s17 + $0x30] sm:$0xff]
        %v1218 = vld [vmem:[%s17 + $0x38] sm:$0xff]
        %v1219 = vadd.f32 %v1203, %v1211
        %v1220 = vadd.f32 %v1204, %v1212
        %v1221 = vadd.f32 %v1205, %v1213
        %v1222 = vadd.f32 %v1206, %v1214
        %v1223 = vadd.f32 %v1207, %v1215
        %v1224 = vadd.f32 %v1208, %v1216
        %v1225 = vadd.f32 %v1209, %v1217
        %v1226 = vadd.f32 %v1210, %v1218
        %vm1227 = vcmask 130048
        %v1228 = vsel %vm1227, %v1219, -inf
        %1229 = vmax.xlane.f32.xlu0 %v1228
        %v1230 = vpop.xlane.xlu0 %1229
        %v1231 = vsel %vm1227, %v1220, -inf
        %1232 = vmax.xlane.f32.xlu0 %v1231
        %v1233 = vpop.xlane.xlu0 %1232
        %v1234 = vsel %vm1227, %v1221, -inf
        %1235 = vmax.xlane.f32.xlu0 %v1234
        %v1236 = vpop.xlane.xlu0 %1235
        %v1237 = vsel %vm1227, %v1222, -inf
        %1238 = vmax.xlane.f32.xlu0 %v1237
        %v1239 = vpop.xlane.xlu0 %1238
        %v1240 = vsel %vm1227, %v1223, -inf
        %1241 = vmax.xlane.f32.xlu0 %v1240
        %v1242 = vpop.xlane.xlu0 %1241
        %v1243 = vsel %vm1227, %v1224, -inf
        %1244 = vmax.xlane.f32.xlu0 %v1243
        %v1245 = vpop.xlane.xlu0 %1244
        %v1246 = vsel %vm1227, %v1225, -inf
        %1247 = vmax.xlane.f32.xlu0 %v1246
        %v1248 = vpop.xlane.xlu0 %1247
        %v1249 = vsel %vm1227, %v1226, -inf
        %1250 = vmax.xlane.f32.xlu0 %v1249
        %v1251 = vpop.xlane.xlu0 %1250
        %v1252 = vsub.f32 %v1219, %v1230
        %v1253 = vsub.f32 %v1220, %v1233
        %v1254 = vsub.f32 %v1221, %v1236
        %v1255 = vsub.f32 %v1222, %v1239
        %v1256 = vsub.f32 %v1223, %v1242
        %v1257 = vsub.f32 %v1224, %v1245
        %v1258 = vsub.f32 %v1225, %v1248
        %v1259 = vsub.f32 %v1226, %v1251
        %v1260 = vmul.f32 %v1252, 1.442695
        %v1261 = vpow.pop %v1260
        %v1262 = vmul.f32 %v1253, 1.442695
        %v1263 = vpow.pop %v1262
        %v1264 = vmul.f32 %v1254, 1.442695
        %v1265 = vpow.pop %v1264
        %v1266 = vmul.f32 %v1255, 1.442695
        %v1267 = vpow.pop %v1266
        %v1268 = vmul.f32 %v1256, 1.442695
        %v1269 = vpow.pop %v1268
        %v1270 = vmul.f32 %v1257, 1.442695
        %v1271 = vpow.pop %v1270
        %v1272 = vmul.f32 %v1258, 1.442695
        %v1273 = vpow.pop %v1272
        %v1274 = vmul.f32 %v1259, 1.442695
        %v1275 = vpow.pop %v1274
        %v1276 = vsel %vm1227, %v1261, 0.0
        %1277 = vadd.xlane.f32.xlu0 %v1276
        %v1278 = vpop.xlane.xlu0 %1277
        %v1279 = vsel %vm1227, %v1263, 0.0
        %1280 = vadd.xlane.f32.xlu0 %v1279
        %v1281 = vpop.xlane.xlu0 %1280
        %v1282 = vsel %vm1227, %v1265, 0.0
        %1283 = vadd.xlane.f32.xlu0 %v1282
        %v1284 = vpop.xlane.xlu0 %1283
        %v1285 = vsel %vm1227, %v1267, 0.0
        %1286 = vadd.xlane.f32.xlu0 %v1285
        %v1287 = vpop.xlane.xlu0 %1286
        %v1288 = vsel %vm1227, %v1269, 0.0
        %1289 = vadd.xlane.f32.xlu0 %v1288
        %v1290 = vpop.xlane.xlu0 %1289
        %v1291 = vsel %vm1227, %v1271, 0.0
        %1292 = vadd.xlane.f32.xlu0 %v1291
        %v1293 = vpop.xlane.xlu0 %1292
        %v1294 = vsel %vm1227, %v1273, 0.0
        %1295 = vadd.xlane.f32.xlu0 %v1294
        %v1296 = vpop.xlane.xlu0 %1295
        %v1297 = vsel %vm1227, %v1275, 0.0
        %1298 = vadd.xlane.f32.xlu0 %v1297
        %v1299 = vpop.xlane.xlu0 %1298
        %v1300 = vrcp.pop %v1278
        %v1301 = vrcp.pop %v1281
        %v1302 = vrcp.pop %v1284
        %v1303 = vrcp.pop %v1287
        %v1304 = vrcp.pop %v1290
        %v1305 = vrcp.pop %v1293
        %v1306 = vrcp.pop %v1296
        %v1307 = vrcp.pop %v1299
        %v1308 = vmul.f32 %v1261, %v1300
        %v1309 = vmul.f32 %v1263, %v1301
        %v1310 = vmul.f32 %v1265, %v1302
        %v1311 = vmul.f32 %v1267, %v1303
        %v1312 = vmul.f32 %v1269, %v1304
        %v1313 = vmul.f32 %v1271, %v1305
        %v1314 = vmul.f32 %v1273, %v1306
        %v1315 = vmul.f32 %v1275, %v1307
        %v1316 = vpack.c.bf16 %v1309, %v1308
        %v1317 = vpack.c.bf16 %v1311, %v1310
        %v1318 = vpack.c.bf16 %v1313, %v1312
        %v1319 = vpack.c.bf16 %v1315, %v1314
        %v1321 = vsel %vm1227, %v1316, 0
        %v1324 = vsel %vm1227, %v1317, 0
        %v1327 = vsel %vm1227, %v1318, 0
        %v1330 = vsel %vm1227, %v1319, 0
        %1332 = vmatpush.bf16.msra.mxu0 0
        %1333 = vmatpush.bf16.msra.mxu0 0
        %1334 = vmatpush.bf16.msra.mxu0 0
        %1335 = vmatpush.bf16.msra.mxu0 0
        %1336 = vmatpush.bf16.msra.mxu0 0
        %1337 = vmatpush.bf16.msra.mxu0 0
        %1338 = vmatpush.bf16.msra.mxu0 0
        %1339 = vmatpush.bf16.msra.mxu0 %v1158
        %1340 = vmatmul.bf16.gmra.mxu0 %v1321
        %v1341 = vpop.f32.mrf.mxu0
        %v1342 = vadd.f32 0.0, %v1341
        %v1343 = vpop.f32.mrf.mxu0
        %v1344 = vadd.f32 0.0, %v1343
        %1345 = vmatmul.bf16.gmra.mxu0 %v1324
        %v1346 = vpop.f32.mrf.mxu0
        %v1347 = vadd.f32 0.0, %v1346
        %v1348 = vpop.f32.mrf.mxu0
        %v1349 = vadd.f32 0.0, %v1348
        %1350 = vmatmul.bf16.gmra.mxu0 %v1327
        %v1351 = vpop.f32.mrf.mxu0
        %v1352 = vadd.f32 0.0, %v1351
        %v1353 = vpop.f32.mrf.mxu0
        %v1354 = vadd.f32 0.0, %v1353
        %1355 = vmatmul.bf16.gmra.mxu0 %v1330
        %v1356 = vpop.f32.mrf.mxu0
        %v1357 = vadd.f32 0.0, %v1356
        %v1358 = vpop.f32.mrf.mxu0
        %v1359 = vadd.f32 0.0, %v1358
        %1360 = vdwg.mxu0
        %v1361 = vmul.f32 %v1342, %v1128
        %v1362 = vmul.f32 %v1344, %v1128
        %v1363 = vadd.f32 %v1361, 0.0
        %v1364 = vadd.f32 %v1362, 0.0
        %v1365 = vmul.f32 %v1347, %v1135
        %v1366 = vmul.f32 %v1349, %v1135
        %v1367 = vadd.f32 %v1363, %v1365
        %v1368 = vadd.f32 %v1364, %v1366
        %v1369 = vmul.f32 %v1352, %v1142
        %v1370 = vmul.f32 %v1354, %v1142
        %v1371 = vadd.f32 %v1367, %v1369
        %v1372 = vadd.f32 %v1368, %v1370
        %v1373 = vmul.f32 %v1357, %v1149
        %v1374 = vmul.f32 %v1359, %v1149
        %v1375 = vadd.f32 %v1371, %v1373
        %v1376 = vadd.f32 %v1372, %v1374
        %v1377 = vpack.c.bf16 %v1376, %v1375
        %v1378 = vld [vmem:[%s880] sm:$0xf]
        %v1379 = vld [vmem:[%s880 + $0x4] sm:$0xf]
        %v1380 = vld [vmem:[%s880 + $0x8] sm:$0xf]
        %v1381 = vld [vmem:[%s880 + $0xc] sm:$0xf]
        %v1386 = vunpack.c.l.b16 %v1378
        %v1387 = vunpack.c.l.b16 %v1379
        %v1388 = vunpack.c.l.b16 %v1380
        %v1389 = vunpack.c.l.b16 %v1381
        %v1390 = vpack.c.b16 %v1387, %v1386
        %v1391 = vpack.c.b16 %v1389, %v1388
        %v1395 = vsel %vm912, %v1377, 0
        %1397 = vmatpush.bf16.msra.mxu0 0
        %1398 = vmatpush.bf16.msra.mxu0 0
        %1399 = vmatpush.bf16.msra.mxu0 0
        %1400 = vmatpush.bf16.msra.mxu0 0
        %1401 = vmatpush.bf16.msra.mxu0 0
        %1402 = vmatpush.bf16.msra.mxu0 0
        %1403 = vmatpush.bf16.msra.mxu0 %v1391
        %1404 = vmatpush.bf16.msra.mxu0 %v1390
        %1405 = vmatmul.bf16.gmra.mxu0 %v1395
        %v1406 = vpop.f32.mrf.mxu0
        %v1407 = vadd.f32 0.0, %v1406
        %v1408 = vpop.f32.mrf.mxu0
        %v1409 = vadd.f32 0.0, %v1408
        %1410 = vdwg.mxu0
        %v1411 = vadd.f32 %v906, %v1407
        %v1412 = vadd.f32 %v907, %v1409
        %v1413 = vld [vmem:[%s883] sm:$0x1]
        %v1414 = vunpack.c.l.bf16 %v1413
        %v1415 = vmul.f32 %v1411, %v1411
        %v1416 = vmul.f32 %v1412, %v1412
        %v1417 = vsel %vm912, %v1415, 0.0
        %1418 = vadd.xlane.f32.xlu0 %v1417
        %v1419 = vpop.xlane.xlu0 %1418
        %v1420 = vsel %vm912, %v1416, 0.0
        %1421 = vadd.xlane.f32.xlu0 %v1420
        %v1422 = vpop.xlane.xlu0 %1421
        %v1423 = vmul.f32 %v1419, %v925
        %v1424 = vmul.f32 %v1422, %v925
        %v1425 = vadd.f32 %v1423, 1e-06
        %v1426 = vadd.f32 %v1424, 1e-06
        %v1427 = vrsqrt.pop %v1425
        %v1428 = vmul.f32 %v1427, %v1425
        %v1429 = vmul.f32 %v1428, %v1427
        %v1430 = vmul.f32 0.5, %v1429
        %v1431 = vsub.f32 1.5, %v1430
        %v1432 = vmul.f32 %v1427, %v1431
        %vm1433 = vweird.f32 %v1425
        %vm1434 = vweird.f32 %v1427
        %vm1435 = vmor %vm1433, %vm1434
        %v1436 = vsel %vm1435, %v1427, %v1432
        %v1437 = vrsqrt.pop %v1426
        %v1438 = vmul.f32 %v1437, %v1426
        %v1439 = vmul.f32 %v1438, %v1437
        %v1440 = vmul.f32 0.5, %v1439
        %v1441 = vsub.f32 1.5, %v1440
        %v1442 = vmul.f32 %v1437, %v1441
        %vm1443 = vweird.f32 %v1426
        %vm1444 = vweird.f32 %v1437
        %vm1445 = vmor %vm1443, %vm1444
        %v1446 = vsel %vm1445, %v1437, %v1442
        %v1447 = vmul.f32 %v1411, %v1436
        %v1448 = vmul.f32 %v1412, %v1446
        %v1449 = vperm.slane %v1414, 0
        %v1450 = vmul.f32 %v1447, %v1449
        %v1451 = vmul.f32 %v1448, %v1449
        %v1452 = vpack.c.bf16 %v1451, %v1450
        %v1453 = vld [vmem:[%s888] sm:$0xf]
        %v1454 = vld [vmem:[%s888 + $0x4] sm:$0xf]
        %v1455 = vld [vmem:[%s888 + $0x8] sm:$0xf]
        %v1456 = vld [vmem:[%s888 + $0xc] sm:$0xf]
        %v1461 = vunpack.c.l.b16 %v1453
        %v1462 = vunpack.c.l.b16 %v1454
        %v1463 = vunpack.c.l.b16 %v1455
        %v1464 = vunpack.c.l.b16 %v1456
        %v1465 = vpack.c.b16 %v1462, %v1461
        %v1466 = vpack.c.b16 %v1464, %v1463
        %v1470 = vsel %vm912, %v1452, 0
        %1472 = vmatpush.bf16.msra.mxu0 0
        %1473 = vmatpush.bf16.msra.mxu0 0
        %1474 = vmatpush.bf16.msra.mxu0 0
        %1475 = vmatpush.bf16.msra.mxu0 0
        %1476 = vmatpush.bf16.msra.mxu0 0
        %1477 = vmatpush.bf16.msra.mxu0 0
        %1478 = vmatpush.bf16.msra.mxu0 %v1466
        %1479 = vmatpush.bf16.msra.mxu0 %v1465
        %1480 = vmatmul.bf16.gmra.mxu0 %v1470
        %v1481 = vpop.f32.mrf.mxu0
        %v1482 = vadd.f32 0.0, %v1481
        %v1483 = vpop.f32.mrf.mxu0
        %v1484 = vadd.f32 0.0, %v1483
        %1485 = vdwg.mxu0
        %v1486 = vld [vmem:[%s736] sm:$0xf]
        %v1487 = vld [vmem:[%s736 + $0x4] sm:$0xf]
        %v1488 = vld [vmem:[%s736 + $0x8] sm:$0xf]
        %v1489 = vld [vmem:[%s736 + $0xc] sm:$0xf]
        %v1494 = vunpack.c.l.b16 %v1486
        %v1495 = vunpack.c.l.b16 %v1487
        %v1496 = vunpack.c.l.b16 %v1488
        %v1497 = vunpack.c.l.b16 %v1489
        %v1498 = vpack.c.b16 %v1495, %v1494
        %v1499 = vpack.c.b16 %v1497, %v1496
        %1502 = vmatpush.bf16.msra.mxu0 0
        %1503 = vmatpush.bf16.msra.mxu0 0
        %1504 = vmatpush.bf16.msra.mxu0 0
        %1505 = vmatpush.bf16.msra.mxu0 0
        %1506 = vmatpush.bf16.msra.mxu0 0
        %1507 = vmatpush.bf16.msra.mxu0 0
        %1508 = vmatpush.bf16.msra.mxu0 %v1499
        %1509 = vmatpush.bf16.msra.mxu0 %v1498
        %1510 = vmatmul.bf16.gmra.mxu0 %v1470
        %v1511 = vpop.f32.mrf.mxu0
        %v1512 = vadd.f32 0.0, %v1511
        %v1513 = vpop.f32.mrf.mxu0
        %v1514 = vadd.f32 0.0, %v1513
        %1515 = vdwg.mxu0
        %v1516 = vxor.u32 %v1482, 2147483648
        %v1517 = vxor.u32 %v1484, 2147483648
        %v1518 = vmul.f32 %v1516, 1.442695
        %v1519 = vpow.pop %v1518
        %v1520 = vmul.f32 %v1517, 1.442695
        %v1521 = vpow.pop %v1520
        %v1522 = vadd.f32 %v1519, 1.0
        %v1523 = vadd.f32 %v1521, 1.0
        %v1524 = vrcp.pop %v1522
        %v1525 = vmul.f32 %v1522, %v1524
        %v1526 = vsub.f32 1.0, %v1525
        %v1527 = vmul.f32 %v1524, %v1526
        %v1528 = vadd.f32 %v1524, %v1527
        %vm1529 = vweird.f32 %v1522
        %vm1530 = vweird.f32 %v1524
        %vm1531 = vmor %vm1529, %vm1530
        %v1532 = vsel %vm1531, %v1524, %v1528
        %v1533 = vand.u32 2147483647, %v1522
        %vm1534 = vcmp.eq.f32.partialorder %v1533, 8.507059e+37
        %v1535 = vand.u32 %v1522, 2147483648
        %v1536 = vor.u32 1.1754944e-38, %v1535
        %v1537 = vsel %vm1534, %v1536, %v1532
        %v1538 = vmul.f32 1.0, %v1537
        %v1539 = vrcp.pop %v1523
        %v1540 = vmul.f32 %v1523, %v1539
        %v1541 = vsub.f32 1.0, %v1540
        %v1542 = vmul.f32 %v1539, %v1541
        %v1543 = vadd.f32 %v1539, %v1542
        %vm1544 = vweird.f32 %v1523
        %vm1545 = vweird.f32 %v1539
        %vm1546 = vmor %vm1544, %vm1545
        %v1547 = vsel %vm1546, %v1539, %v1543
        %v1548 = vand.u32 2147483647, %v1523
        %vm1549 = vcmp.eq.f32.partialorder %v1548, 8.507059e+37
        %v1550 = vand.u32 %v1523, 2147483648
        %v1551 = vor.u32 1.1754944e-38, %v1550
        %v1552 = vsel %vm1549, %v1551, %v1547
        %v1553 = vmul.f32 1.0, %v1552
        %v1554 = vmul.f32 %v1482, %v1538
        %v1555 = vmul.f32 %v1484, %v1553
        %v1556 = vmul.f32 %v1554, %v1512
        %v1557 = vmul.f32 %v1555, %v1514
        %v1558 = vpack.c.bf16 %v1557, %v1556
        %v1559 = vld [vmem:[%s893] sm:$0xf]
        %v1560 = vld [vmem:[%s893 + $0x4] sm:$0xf]
        %v1561 = vld [vmem:[%s893 + $0x8] sm:$0xf]
        %v1562 = vld [vmem:[%s893 + $0xc] sm:$0xf]
        %v1563 = vld [vmem:[%s893 + $0x10] sm:$0xf]
        %v1564 = vld [vmem:[%s893 + $0x14] sm:$0xf]
        %v1565 = vld [vmem:[%s893 + $0x18] sm:$0xf]
        %v1566 = vld [vmem:[%s893 + $0x1c] sm:$0xf]
        %v1575 = vunpack.c.l.b16 %v1559
        %v1576 = vunpack.c.l.b16 %v1560
        %v1577 = vunpack.c.l.b16 %v1561
        %v1578 = vunpack.c.l.b16 %v1562
        %v1579 = vunpack.c.l.b16 %v1563
        %v1580 = vunpack.c.l.b16 %v1564
        %v1581 = vunpack.c.l.b16 %v1565
        %v1582 = vunpack.c.l.b16 %v1566
        %v1583 = vpack.c.b16 %v1576, %v1575
        %v1584 = vpack.c.b16 %v1578, %v1577
        %v1585 = vpack.c.b16 %v1580, %v1579
        %v1586 = vpack.c.b16 %v1582, %v1581
        %vm1591 = vcmask 523264
        %v1593 = vsel %vm1591, %v1558, 0
        %1595 = vmatpush.bf16.msra.mxu0 0
        %1596 = vmatpush.bf16.msra.mxu0 0
        %1597 = vmatpush.bf16.msra.mxu0 0
        %1598 = vmatpush.bf16.msra.mxu0 0
        %1599 = vmatpush.bf16.msra.mxu0 %v1586
        %1600 = vmatpush.bf16.msra.mxu0 %v1585
        %1601 = vmatpush.bf16.msra.mxu0 %v1584
        %1602 = vmatpush.bf16.msra.mxu0 %v1583
        %1603 = vmatmul.bf16.gmra.mxu0 %v1593
        %v1604 = vpop.f32.mrf.mxu0
        %v1605 = vadd.f32 0.0, %v1604
        %v1606 = vpop.f32.mrf.mxu0
        %v1607 = vadd.f32 0.0, %v1606
        %1608 = vdwg.mxu0
        %v1609 = vadd.f32 %v1411, %v1605
        %v1610 = vadd.f32 %v1412, %v1607
        %1611 = vst.msk [vmem:[#allocation2] sm:$0xff] %vm912, %v1609
        %1612 = vst.msk [vmem:[#allocation2 + $0x8] sm:$0xff] %vm912, %v1610
        %p1613 = scmp.eq.s32.totalorder %s37, 1
        // Predicated region
        $region125: #{tpu_custom_call.1} parent=99 // pred_check
          %p1614 = pneg %p1613
        $region126: #{tpu_custom_call.1} parent=99 // pred_check_branch
          %1616 = sbr.rel (%p1614) target = $region128
        $region127: #{tpu_custom_call.1} parent=99 // pred_region
          %v1617 = vld [vmem:[#allocation2] sm:$0xff]
          %v1618 = vld [vmem:[#allocation2 + $0x8] sm:$0xff]
          %v1620 = vrot.slane %v1617, 7
          %v1623 = vrot.slane %v1618, 6
          %vm1625 = vcmask 1040384
          %v1626 = vsel %vm1625, %v1620, %v1623
          %v1627 = vld [vmem:[%s18] sm:$0x1]
          %v1628 = vunpack.c.l.bf16 %v1627
          %v1629 = vmul.f32 %v1626, %v1626
          %vm1630 = vcmask 254976
          %v1631 = vsel %vm1630, %v1629, 0.0
          %1632 = vadd.xlane.f32.xlu0 %v1631
          %v1633 = vpop.xlane.xlu0 %1632
          %v1634 = vmul.f32 %v1633, %v925
          %v1635 = vadd.f32 %v1634, 1e-06
          %v1636 = vrsqrt.pop %v1635
          %v1637 = vmul.f32 %v1636, %v1635
          %v1638 = vmul.f32 %v1637, %v1636
          %v1639 = vmul.f32 0.5, %v1638
          %v1640 = vsub.f32 1.5, %v1639
          %v1641 = vmul.f32 %v1636, %v1640
          %vm1642 = vweird.f32 %v1635
          %vm1643 = vweird.f32 %v1636
          %vm1644 = vmor %vm1642, %vm1643
          %v1645 = vsel %vm1644, %v1636, %v1641
          %v1646 = vmul.f32 %v1626, %v1645
          %v1647 = vperm.slane %v1628, 0
          %v1648 = vmul.f32 %v1646, %v1647
          %v1649 = vpack.c.bf16 %v1648, %v1648
          %v1650 = vld [vmem:[#allocation11] sm:$0xf]
          %v1651 = vld [vmem:[#allocation11 + $0x4] sm:$0xf]
          %v1652 = vld [vmem:[#allocation11 + $0x8] sm:$0xf]
          %v1653 = vld [vmem:[#allocation11 + $0xc] sm:$0xf]
          %v1658 = vunpack.c.l.b16 %v1650
          %v1659 = vunpack.c.l.b16 %v1651
          %v1660 = vunpack.c.l.b16 %v1652
          %v1661 = vunpack.c.l.b16 %v1653
          %v1662 = vpack.c.b16 %v1659, %v1658
          %v1663 = vpack.c.b16 %v1661, %v1660
          %v1667 = vsel %vm912, %v1649, 0
          %1669 = vmatpush.bf16.msra.mxu0 0
          %1670 = vmatpush.bf16.msra.mxu0 0
          %1671 = vmatpush.bf16.msra.mxu0 0
          %1672 = vmatpush.bf16.msra.mxu0 0
          %1673 = vmatpush.bf16.msra.mxu0 0
          %1674 = vmatpush.bf16.msra.mxu0 0
          %1675 = vmatpush.bf16.msra.mxu0 %v1663
          %1676 = vmatpush.bf16.msra.mxu0 %v1662
          %1677 = vmatmul.bf16.gmra.mxu0 %v1667
          %v1678 = vpop.f32.mrf.mxu0
          %v1679 = vadd.f32 0.0, %v1678
          %v1680 = vpop.f32.mrf.mxu0
          %1681 = vdwg.mxu0
          %1682 = vst [vmem:[#allocation12] sm:$0x3] %v1679
        $region128: #{tpu_custom_call.1} parent=99 // pred_fallthru
          _
        // Predicated region
        $region129: #{tpu_custom_call.1} parent=99 // pred_check
          %p1683 = pneg %p530
        $region130: #{tpu_custom_call.1} parent=99 // pred_check_branch
          %1685 = sbr.rel (%p1683) target = $region132
        $region131: #{tpu_custom_call.1} parent=99 // pred_region
          %1687 = vsyncadd [#allocation5], 0
          %s1689 = sshll.u32 [#allocation12], 4
          %s1690 = int_to_ptr.vmem [resolvable:$true] %s1689
          %s1691 = sshll.u32 %s20, 4
          %s1692 = int_to_ptr.hbm [resolvable:$true] %s1691
          %1694 = dma.vmem_to_hbm [thread:$0]  %s1690, 32, %s1692, [#allocation5]
        $region132: #{tpu_custom_call.1} parent=99 // pred_fallthru
          _
        // Predicated region
        $region133: #{tpu_custom_call.1} parent=99 // pred_check
          %p1695 = pneg %p530
        $region134: #{tpu_custom_call.1} parent=99 // pred_check_branch
          %1697 = sbr.rel (%p1695) target = $region136
        $region135: #{tpu_custom_call.1} parent=99 // pred_region
          %1699 = dma.done [#allocation5], 32
        $region136: #{tpu_custom_call.1} parent=99 // pred_fallthru
          _
      $region100: #{tpu_custom_call.1} parent=5 // pred_fallthru
        _
      %p1700 = scmp.le.s32.totalorder 2, %s32
      // Predicated region
      $region137: #{tpu_custom_call.1} parent=5 // pred_check
        %p1701 = pneg %p1700
      $region138: #{tpu_custom_call.1} parent=5 // pred_check_branch
        %1703 = sbr.rel (%p1701) target = $region140
      $region139: #{tpu_custom_call.1} parent=5 // pred_region
        %s1704 = ssub.s32 %s32, 2
      $region140: #{tpu_custom_call.1} parent=5 // pred_fallthru
        _
    $region6: #{tpu_custom_call.1} parent=1 // loop_footer
      %s36 = sadd.s32 1, %s32
    $region7: #{tpu_custom_call.1} parent=1 // loop_footer_branch
      %31 = sbr.rel target = $region3
    $region8: #{tpu_custom_call.1} parent=1 // loop_exit
      _
    %1705 = vsyncpa [#allocation4], 1
    %s1706 = scalar_lea.sflag [#allocation4], 1
    %1707 = vsyncpa %s1706, 1
    %1708 = vsyncpa [#allocation7], 1
    %s1709 = scalar_lea.sflag [#allocation7], 1
    %1710 = vsyncpa %s1709, 1
    %1711 = vsyncpa [#allocation10], 1
    %1712 = vsyncpa [#allocation5], 1
    %s1713 = scalar_lea.sflag [#allocation5], 1
    %1714 = vsyncpa %s1713, 1

</llo_original>
